<compile_context>
chip_gen: v7x
topology: tpu7x:2x2x1
jax: 0.10.0
libtpu: 0.0.40
codegen_flags: <defaults>
</compile_context>

<pallas_src>
import functools
import math

import jax
import jax.numpy as jnp
from jax.experimental import pallas as pl
from jax.experimental.pallas import tpu as pltpu


# Flip to True on v6e/v7x for native-bf16 MXU throughput and halved weight DMA.
# Kept False here to match the f32 PyTorch reference numerics.
USE_BF16_WEIGHTS = False


# ------------------------------ in-kernel math ------------------------------ #

def _mm(a, b, dt):
    """a @ b on the MXU in dtype `dt` with f32 accumulation."""
    return jnp.dot(a.astype(dt), b.astype(dt), preferred_element_type=jnp.float32)


def _gelu_tanh(x):
    # TODO(synk): HF "gelu" is erf-based; tanh approximation differs at ~1e-3.
    c = math.sqrt(2.0 / math.pi)
    return 0.5 * x * (1.0 + jnp.tanh(c * (x + 0.044715 * x * x * x)))


def _layernorm(x, gamma, beta, eps):
    mu = jnp.mean(x, axis=-1, keepdims=True)
    var = jnp.mean((x - mu) * (x - mu), axis=-1, keepdims=True)
    return (x - mu) * jax.lax.rsqrt(var + eps) * gamma + beta


# ----------------------------- Pallas kernel -------------------------------- #

def _encoder_layer_kernel(h_ref, mask_ref,
                          ln0_g_ref, ln0_b_ref,
                          wqkv_ref, bqkv_ref, wo_ref, bo_ref,
                          ln1_g_ref, ln1_b_ref,
                          wi_ref, bi_ref, wo2_ref, bo2_ref,
                          ln2_g_ref, ln2_b_ref,
                          o_ref,
                          *, num_heads, head_dim, eps, fuse_input_ln,
                          compute_dtype):
    """One full BERT encoder layer for a block of batch elements, fused in VMEM."""
    Bb, S, H = h_ref.shape
    scale = 1.0 / math.sqrt(head_dim)
    dt = compute_dtype

    x = h_ref[...].astype(jnp.float32).reshape(Bb * S, H)      # (Bb*S, H)
    if fuse_input_ln:
        # Embedding LayerNorm fused into layer 0 (no separate kernel / HBM pass).
        x = _layernorm(x, ln0_g_ref[...], ln0_b_ref[...], eps)

    # ---- fused QKV projection: one (Bb*S, H) @ (H, 3H) MXU matmul (K = H deep) ----
    qkv = _mm(x, wqkv_ref[...], dt) + bqkv_ref[...]             # (Bb*S, 3H), f32
    qkv = qkv.reshape(Bb, S, 3 * H)

    # Hoisted once: JAX does not CSE broadcast_in_dim inside the unrolled loop.
    mask_b = jnp.broadcast_to(mask_ref[...].astype(jnp.float32), (Bb, S, S))

    # ---- multi-head self-attention.  Heads unrolled (nH = 4 here).
    # TODO(synk): switch to lax.fori_loop(unroll=True) + VMEM scratch once nH > ~4.
    ctx_parts = []
    for hh in range(num_heads):
        lo = hh * head_dim
        hi = lo + head_dim
        q = qkv[:, :, lo:hi]                                    # (Bb, S, d)
        k = qkv[:, :, H + lo:H + hi]
        v = qkv[:, :, 2 * H + lo:2 * H + hi]

        s = jnp.einsum('bqd,bkd->bqk', q.astype(dt), k.astype(dt),
                       preferred_element_type=jnp.float32) * scale
        s = s + mask_b
        s = s - jnp.max(s, axis=-1, keepdims=True)
        p = jnp.exp(s)
        p = p / jnp.sum(p, axis=-1, keepdims=True)              # exact softmax
        ctx_parts.append(jnp.einsum('bqk,bkd->bqd', p.astype(dt), v.astype(dt),
                                    preferred_element_type=jnp.float32))

    # Single lane-concat, then ONE output-projection matmul with K = H
    # (was nH separate K=d matmuls summed into a vreg accumulator).
    ctx = jnp.concatenate(ctx_parts, axis=-1).reshape(Bb * S, H)
    attn_out = _mm(ctx, wo_ref[...], dt) + bo_ref[...]

    # ---- Add & LayerNorm 1 (fused epilogue, no HBM round trip) ----
    h1 = _layernorm(attn_out + x, ln1_g_ref[...], ln1_b_ref[...], eps)

    # ---- FFN: intermediate (gelu) + output projection ----
    inter = _gelu_tanh(_mm(h1, wi_ref[...], dt) + bi_ref[...])
    ffn = _mm(inter, wo2_ref[...], dt) + bo2_ref[...]

    # ---- Add & LayerNorm 2 ----
    out = _layernorm(ffn + h1, ln2_g_ref[...], ln2_b_ref[...], eps)
    o_ref[...] = out.reshape(Bb, S, H).astype(o_ref.dtype)


# ------------------------------- layer wrapper ------------------------------ #

def _pick_batch_block(B, S):
    """Largest divisor of B whose row count Bb*S targets >= 128 MXU rows."""
    target = max(1, pl.cdiv(128, S))
    bb = 1
    for cand in range(1, B + 1):
        if B % cand == 0 and cand <= target:
            bb = cand
    return bb


def encoder_layer(h, add_mask, lp, *, num_heads, eps=1e-12,
                  fuse_input_ln=False, emb_ln=None,
                  compute_dtype=jnp.float32):
    """h: [B, S, H] f32; add_mask: [B, 1, S] additive mask; lp: layer params."""
    B, S, H = h.shape
    I = lp["wi"].shape[1]
    d = H // num_heads
    Bb = _pick_batch_block(B, S)

    if emb_ln is None:
        ln0_g = jnp.ones((H,), jnp.float32)
        ln0_b = jnp.zeros((H,), jnp.float32)
    else:
        ln0_g, ln0_b = emb_ln

    def rep2(shape):
        # Weight / bias block constant across the batch grid -> DMA'd once per step.
        return pl.BlockSpec(shape, lambda b: (0, 0))

    # Explicit VMEM budget: all weights resident (+double buffer) + activation blocks,
    # with headroom.  Capped at 64 MiB so the same code stays within v7x's VMEM.
    w_item = jnp.dtype(compute_dtype).itemsize
    weight_bytes = w_item * (H * 3 * H + H * H + H * I + I * H)
    param_bytes = 4 * (3 * H + H + I + H + 8 * H)                   # biases + LN (f32)
    act_bytes = 4 * (2 * Bb * S * H + Bb * S + Bb * S * 3 * H)      # in/out/mask/qkv
    vmem_limit = int(min(64 << 20, max(32 << 20,
                                       2 * (weight_bytes + param_bytes + act_bytes)
                                       + (4 << 20))))

    kernel = functools.partial(_encoder_layer_kernel, num_heads=num_heads,
                               head_dim=d, eps=eps, fuse_input_ln=fuse_input_ln,
                               compute_dtype=compute_dtype)
    return pl.pallas_call(
        kernel,
        out_shape=jax.ShapeDtypeStruct((B, S, H), jnp.float32),
        grid=(B // Bb,),
        in_specs=[
            pl.BlockSpec((Bb, S, H), lambda b: (b, 0, 0)),   # hidden states
            pl.BlockSpec((Bb, 1, S), lambda b: (b, 0, 0)),   # additive mask
            rep2((1, H)), rep2((1, H)),                      # (fused) embedding LN
            rep2((H, 3 * H)), rep2((1, 3 * H)),              # fused QKV
            rep2((H, H)), rep2((1, H)),                      # attn out proj
            rep2((1, H)), rep2((1, H)),                      # LN1 gamma/beta
            rep2((H, I)), rep2((1, I)),                      # FFN intermediate
            rep2((I, H)), rep2((1, H)),                      # FFN output
            rep2((1, H)), rep2((1, H)),                      # LN2 gamma/beta
        ],
        out_specs=pl.BlockSpec((Bb, S, H), lambda b: (b, 0, 0)),
        compiler_params=pltpu.CompilerParams(
            dimension_semantics=("parallel",),
            vmem_limit_bytes=vmem_limit),
    )(h, add_mask,
      ln0_g.reshape(1, H), ln0_b.reshape(1, H),
      lp["wqkv"], lp["bqkv"].reshape(1, 3 * H),
      lp["wo"], lp["bo"].reshape(1, H),
      lp["ln1_g"].reshape(1, H), lp["ln1_b"].reshape(1, H),
      lp["wi"], lp["bi"].reshape(1, I),
      lp["wo2"], lp["bo2"].reshape(1, H),
      lp["ln2_g"].reshape(1, H), lp["ln2_b"].reshape(1, H))


# --------------------------- parameter construction ------------------------- #

def init_params(key, *, vocab, max_pos, type_vocab, hidden, heads,
                intermediate, layers, use_bf16_weights=False):
    w_dtype = jnp.bfloat16 if use_bf16_weights else jnp.float32

    def nrm(k, shape):
        return 0.02 * jax.random.normal(k, shape, dtype=jnp.float32)

    keys = jax.random.split(key, 4 + layers)
    params = {
        "word_emb": nrm(keys[0], (vocab, hidden)),
        "pos_emb": nrm(keys[1], (max_pos, hidden)),
        "type_emb": nrm(keys[2], (type_vocab, hidden)),
        "emb_ln_g": jnp.ones((hidden,), jnp.float32),
        "emb_ln_b": jnp.zeros((hidden,), jnp.float32),
        "num_heads": heads,
        "compute_dtype": w_dtype,
        "layers": [],
    }
    kp = jax.random.split(keys[3], 2)
    params["wp"] = nrm(kp[0], (hidden, hidden))
    params["bp"] = jnp.zeros((hidden,), jnp.float32)

    for li in range(layers):
        lk = jax.random.split(keys[4 + li], 6)
        wq = nrm(lk[0], (hidden, hidden))
        wk = nrm(lk[1], (hidden, hidden))
        wv = nrm(lk[2], (hidden, hidden))
        lyr = {
            # Matmul weights stored in the compute dtype in HBM (bf16 path really
            # halves the weight DMA).  Biases / LN params stay f32.
            "wqkv": jnp.concatenate([wq, wk, wv], axis=1).astype(w_dtype),
            "bqkv": jnp.zeros((3 * hidden,), jnp.float32),
            "wo": nrm(lk[3], (hidden, hidden)).astype(w_dtype),
            "bo": jnp.zeros((hidden,), jnp.float32),
            "wi": nrm(lk[4], (hidden, intermediate)).astype(w_dtype),
            "bi": jnp.zeros((intermediate,), jnp.float32),
            "wo2": nrm(lk[5], (intermediate, hidden)).astype(w_dtype),
            "bo2": jnp.zeros((hidden,), jnp.float32),
            "ln1_g": jnp.ones((hidden,), jnp.float32),
            "ln1_b": jnp.zeros((hidden,), jnp.float32),
            "ln2_g": jnp.ones((hidden,), jnp.float32),
            "ln2_b": jnp.zeros((hidden,), jnp.float32),
        }
        params["layers"].append(lyr)
    return params


# ------------------------------- forward pass ------------------------------- #

def custom_bert_forward(params, input_ids, attention_mask, token_type_ids=None,
                        gabriel_mask=None):
    # TODO(synk): gabriel_mask early-return in the reference is a bug (it would crash
    # the surrounding BertModel); we follow the standard attention path.
    del gabriel_mask
    B, S = input_ids.shape
    H = params["word_emb"].shape[1]
    if token_type_ids is None:
        token_type_ids = jnp.zeros_like(input_ids)

    # Embedding gathers + sum stay in XLA (glue); the embedding LayerNorm is fused
    # into the first encoder-layer kernel below.
    emb = (params["word_emb"][input_ids]
           + params["pos_emb"][jnp.arange(S)][None, :, :]
           + params["type_emb"][token_type_ids]).astype(jnp.float32)

    # Classic BERT extended additive mask.
    add_mask = ((1.0 - attention_mask.astype(jnp.float32)) * -10000.0
                ).reshape(B, 1, S)

    h = emb
    for li, lp in enumerate(params["layers"]):
        h = encoder_layer(
            h, add_mask, lp,
            num_heads=params["num_heads"],
            fuse_input_ln=(li == 0),
            emb_ln=(params["emb_ln_g"], params["emb_ln_b"]) if li == 0 else None,
            compute_dtype=params["compute_dtype"])

    sequence_output = h
    # Pooler head: a B-row matmul + tanh — left to plain XLA (not worth a kernel launch).
    pooled_output = jnp.tanh(sequence_output[:, 0, :]
                             @ params["wp"].astype(jnp.float32) + params["bp"])
    return sequence_output, pooled_output


# ----------------------------------- main ----------------------------------- #

if __name__ == "__main__":
    B, S = 2, 8
    HIDDEN, HEADS, INTER, LAYERS = 32, 4, 64, 2
    VOCAB, MAX_POS, TYPE_VOCAB = 50, 16, 2

    key = jax.random.PRNGKey(0)
    k_params, k_ids = jax.random.split(key)
    params = init_params(k_params, vocab=VOCAB, max_pos=MAX_POS,
                         type_vocab=TYPE_VOCAB, hidden=HIDDEN, heads=HEADS,
                         intermediate=INTER, layers=LAYERS,
                         use_bf16_weights=USE_BF16_WEIGHTS)

    input_ids = jax.random.randint(k_ids, (B, S), 1, VOCAB, dtype=jnp.int32)
    attention_mask = jnp.ones((B, S), dtype=jnp.int32).at[1, 6:].set(0)
    gabriel_mask = jnp.array([[1, 1, 0, 0, 0, 0, 0, 0],
                              [1, 1, 0, 0, 0, 0, 0, 0]], dtype=jnp.int32)

    seq_out, pooled = custom_bert_forward(params, input_ids, attention_mask,
                                          token_type_ids=None,
                                          gabriel_mask=gabriel_mask)
    jax.block_until_ready((seq_out, pooled))
    assert seq_out.shape == (B, S, HIDDEN) and pooled.shape == (B, HIDDEN)
    assert bool(jnp.all(jnp.isfinite(seq_out))) and bool(jnp.all(jnp.isfinite(pooled)))
    print("KERNEL_OK")
</pallas_src>

<mosaic_0001>
module attributes {stable_mosaic.version = 11 : i64} {
  func.func @_encoder_layer_kernel(%arg0: i32, %arg1: memref<2x8x32xf32, #tpu.memory_space<vmem>>, %arg2: memref<2x1x8xf32, #tpu.memory_space<vmem>>, %arg3: memref<1x32xf32, #tpu.memory_space<vmem>>, %arg4: memref<1x32xf32, #tpu.memory_space<vmem>>, %arg5: memref<32x96xf32, #tpu.memory_space<vmem>>, %arg6: memref<1x96xf32, #tpu.memory_space<vmem>>, %arg7: memref<32x32xf32, #tpu.memory_space<vmem>>, %arg8: memref<1x32xf32, #tpu.memory_space<vmem>>, %arg9: memref<1x32xf32, #tpu.memory_space<vmem>>, %arg10: memref<1x32xf32, #tpu.memory_space<vmem>>, %arg11: memref<32x64xf32, #tpu.memory_space<vmem>>, %arg12: memref<1x64xf32, #tpu.memory_space<vmem>>, %arg13: memref<64x32xf32, #tpu.memory_space<vmem>>, %arg14: memref<1x32xf32, #tpu.memory_space<vmem>>, %arg15: memref<1x32xf32, #tpu.memory_space<vmem>>, %arg16: memref<1x32xf32, #tpu.memory_space<vmem>>, %arg17: memref<2x8x32xf32, #tpu.memory_space<vmem>>) attributes {dimension_semantics = [#tpu.dimension_semantics<parallel>], iteration_bounds = array<i64: 1>, scalar_prefetch = 0 : i64, scratch_operands = 0 : i64, tpu.core_type = #tpu.core_type<tc>, window_params = [{transform_indices = @transform_0, window_bounds = array<i64: 2, 8, 32>}, {transform_indices = @transform_1, window_bounds = array<i64: 2, 1, 8>}, {pipeline_mode = #tpu.pipeline_mode<synchronous>, transform_indices = @transform_2, window_bounds = array<i64: 1, 32>}, {pipeline_mode = #tpu.pipeline_mode<synchronous>, transform_indices = @transform_3, window_bounds = array<i64: 1, 32>}, {pipeline_mode = #tpu.pipeline_mode<synchronous>, transform_indices = @transform_4, window_bounds = array<i64: 32, 96>}, {pipeline_mode = #tpu.pipeline_mode<synchronous>, transform_indices = @transform_5, window_bounds = array<i64: 1, 96>}, {pipeline_mode = #tpu.pipeline_mode<synchronous>, transform_indices = @transform_6, window_bounds = array<i64: 32, 32>}, {pipeline_mode = #tpu.pipeline_mode<synchronous>, transform_indices = @transform_7, window_bounds = array<i64: 1, 32>}, {pipeline_mode = #tpu.pipeline_mode<synchronous>, transform_indices = @transform_8, window_bounds = array<i64: 1, 32>}, {pipeline_mode = #tpu.pipeline_mode<synchronous>, transform_indices = @transform_9, window_bounds = array<i64: 1, 32>}, {pipeline_mode = #tpu.pipeline_mode<synchronous>, transform_indices = @transform_10, window_bounds = array<i64: 32, 64>}, {pipeline_mode = #tpu.pipeline_mode<synchronous>, transform_indices = @transform_11, window_bounds = array<i64: 1, 64>}, {pipeline_mode = #tpu.pipeline_mode<synchronous>, transform_indices = @transform_12, window_bounds = array<i64: 64, 32>}, {pipeline_mode = #tpu.pipeline_mode<synchronous>, transform_indices = @transform_13, window_bounds = array<i64: 1, 32>}, {pipeline_mode = #tpu.pipeline_mode<synchronous>, transform_indices = @transform_14, window_bounds = array<i64: 1, 32>}, {pipeline_mode = #tpu.pipeline_mode<synchronous>, transform_indices = @transform_15, window_bounds = array<i64: 1, 32>}, {transform_indices = @transform_16, window_bounds = array<i64: 2, 8, 32>}]} {
    %c0 = arith.constant 0 : index
    %c0_0 = arith.constant 0 : index
    %c0_1 = arith.constant 0 : index
    %0 = vector.load %arg1[%c0, %c0_0, %c0_1] : memref<2x8x32xf32, #tpu.memory_space<vmem>>, vector<2x8x32xf32>
    %1 = vector.shape_cast %0 : vector<2x8x32xf32> to vector<16x32xf32>
    %c0_2 = arith.constant 0 : index
    %c0_3 = arith.constant 0 : index
    %2 = vector.load %arg3[%c0_2, %c0_3] : memref<1x32xf32, #tpu.memory_space<vmem>>, vector<1x32xf32>
    %c0_4 = arith.constant 0 : index
    %c0_5 = arith.constant 0 : index
    %3 = vector.load %arg4[%c0_4, %c0_5] : memref<1x32xf32, #tpu.memory_space<vmem>>, vector<1x32xf32>
    %cst = arith.constant dense<0.000000e+00> : vector<16xf32>
    %4 = vector.multi_reduction <add>, %1, %cst [1] : vector<16x32xf32> to vector<16xf32>
    %5 = vector.shape_cast %4 : vector<16xf32> to vector<16x1xf32>
    %cst_6 = arith.constant 3.200000e+01 : f32
    %6 = vector.broadcast %cst_6 : f32 to vector<16x1xf32>
    %7 = arith.divf %5, %6 : vector<16x1xf32>
    %8 = vector.broadcast %7 : vector<16x1xf32> to vector<16x32xf32>
    %9 = arith.subf %1, %8 : vector<16x32xf32>
    %10 = vector.broadcast %7 : vector<16x1xf32> to vector<16x32xf32>
    %11 = arith.subf %1, %10 : vector<16x32xf32>
    %12 = arith.mulf %9, %11 : vector<16x32xf32>
    %cst_7 = arith.constant dense<0.000000e+00> : vector<16xf32>
    %13 = vector.multi_reduction <add>, %12, %cst_7 [1] : vector<16x32xf32> to vector<16xf32>
    %14 = vector.shape_cast %13 : vector<16xf32> to vector<16x1xf32>
    %cst_8 = arith.constant 3.200000e+01 : f32
    %15 = vector.broadcast %cst_8 : f32 to vector<16x1xf32>
    %16 = arith.divf %14, %15 : vector<16x1xf32>
    %17 = vector.broadcast %7 : vector<16x1xf32> to vector<16x32xf32>
    %18 = arith.subf %1, %17 : vector<16x32xf32>
    %cst_9 = arith.constant 9.99999996E-13 : f32
    %19 = vector.broadcast %cst_9 : f32 to vector<16x1xf32>
    %20 = arith.addf %16, %19 : vector<16x1xf32>
    %21 = math.rsqrt %20 : vector<16x1xf32>
    %22 = vector.broadcast %21 : vector<16x1xf32> to vector<16x32xf32>
    %23 = arith.mulf %18, %22 : vector<16x32xf32>
    %24 = vector.broadcast %2 : vector<1x32xf32> to vector<16x32xf32>
    %25 = arith.mulf %23, %24 : vector<16x32xf32>
    %26 = vector.broadcast %3 : vector<1x32xf32> to vector<16x32xf32>
    %27 = arith.addf %25, %26 : vector<16x32xf32>
    %c0_10 = arith.constant 0 : index
    %c0_11 = arith.constant 0 : index
    %28 = vector.load %arg5[%c0_10, %c0_11] : memref<32x96xf32, #tpu.memory_space<vmem>>, vector<32x96xf32>
    %cst_12 = arith.constant dense<0.000000e+00> : vector<16x96xf32>
    %29 = tpu.matmul %27, %28, %cst_12 {dimension_numbers = #tpu.dot_dimension_numbers<[1], [0], [0], [1], [0, 0, 1, 1], [], []>} : vector<16x32xf32>, vector<32x96xf32>, vector<16x96xf32> -> vector<16x96xf32>
    %c0_13 = arith.constant 0 : index
    %c0_14 = arith.constant 0 : index
    %30 = vector.load %arg6[%c0_13, %c0_14] : memref<1x96xf32, #tpu.memory_space<vmem>>, vector<1x96xf32>
    %31 = vector.broadcast %30 : vector<1x96xf32> to vector<16x96xf32>
    %32 = arith.addf %29, %31 : vector<16x96xf32>
    %33 = vector.shape_cast %32 : vector<16x96xf32> to vector<2x8x96xf32>
    %c0_15 = arith.constant 0 : index
    %c0_16 = arith.constant 0 : index
    %c0_17 = arith.constant 0 : index
    %34 = vector.load %arg2[%c0_15, %c0_16, %c0_17] : memref<2x1x8xf32, #tpu.memory_space<vmem>>, vector<2x1x8xf32>
    %35 = vector.shape_cast %34 : vector<2x1x8xf32> to vector<2x1x8xf32>
    %36 = vector.broadcast %35 : vector<2x1x8xf32> to vector<2x8x8xf32>
    %37 = vector.extract_strided_slice %33 {offsets = [0, 0, 0], sizes = [2, 8, 8], strides = [1, 1, 1]} : vector<2x8x96xf32> to vector<2x8x8xf32>
    %38 = vector.extract_strided_slice %33 {offsets = [0, 0, 32], sizes = [2, 8, 8], strides = [1, 1, 1]} : vector<2x8x96xf32> to vector<2x8x8xf32>
    %39 = vector.extract_strided_slice %33 {offsets = [0, 0, 64], sizes = [2, 8, 8], strides = [1, 1, 1]} : vector<2x8x96xf32> to vector<2x8x8xf32>
    "tpu.trace_start"() <{level = 10 : i32, message = "bqd,bkd->bqk"}> : () -> ()
    %cst_18 = arith.constant dense<0.000000e+00> : vector<2x8x8xf32>
    %40 = tpu.matmul %37, %38, %cst_18 {dimension_numbers = #tpu.dot_dimension_numbers<[2], [2], [1], [1], [0, 0, 0, 1, 1, 1], [0], [0]>} : vector<2x8x8xf32>, vector<2x8x8xf32>, vector<2x8x8xf32> -> vector<2x8x8xf32>
    "tpu.trace_stop"() : () -> ()
    %cst_19 = arith.constant 0.353553385 : f32
    %41 = vector.broadcast %cst_19 : f32 to vector<2x8x8xf32>
    %42 = arith.mulf %40, %41 : vector<2x8x8xf32>
    %43 = arith.addf %42, %36 : vector<2x8x8xf32>
    %cst_20 = arith.constant dense<0xFF800000> : vector<2x8xf32>
    %44 = vector.multi_reduction <maximumf>, %43, %cst_20 [2] : vector<2x8x8xf32> to vector<2x8xf32>
    %45 = vector.shape_cast %44 : vector<2x8xf32> to vector<2x8x1xf32>
    %46 = vector.broadcast %45 : vector<2x8x1xf32> to vector<2x8x8xf32>
    %47 = arith.subf %43, %46 : vector<2x8x8xf32>
    %48 = math.exp %47 : vector<2x8x8xf32>
    %cst_21 = arith.constant dense<0.000000e+00> : vector<2x8xf32>
    %49 = vector.multi_reduction <add>, %48, %cst_21 [2] : vector<2x8x8xf32> to vector<2x8xf32>
    %50 = vector.shape_cast %49 : vector<2x8xf32> to vector<2x8x1xf32>
    %51 = vector.broadcast %50 : vector<2x8x1xf32> to vector<2x8x8xf32>
    %52 = arith.divf %48, %51 : vector<2x8x8xf32>
    "tpu.trace_start"() <{level = 10 : i32, message = "bqk,bkd->bqd"}> : () -> ()
    %cst_22 = arith.constant dense<0.000000e+00> : vector<2x8x8xf32>
    %53 = tpu.matmul %52, %39, %cst_22 {dimension_numbers = #tpu.dot_dimension_numbers<[2], [1], [1], [2], [0, 0, 0, 1, 1, 2], [0], [0]>} : vector<2x8x8xf32>, vector<2x8x8xf32>, vector<2x8x8xf32> -> vector<2x8x8xf32>
    "tpu.trace_stop"() : () -> ()
    %54 = vector.extract_strided_slice %33 {offsets = [0, 0, 8], sizes = [2, 8, 8], strides = [1, 1, 1]} : vector<2x8x96xf32> to vector<2x8x8xf32>
    %55 = vector.extract_strided_slice %33 {offsets = [0, 0, 40], sizes = [2, 8, 8], strides = [1, 1, 1]} : vector<2x8x96xf32> to vector<2x8x8xf32>
    %56 = vector.extract_strided_slice %33 {offsets = [0, 0, 72], sizes = [2, 8, 8], strides = [1, 1, 1]} : vector<2x8x96xf32> to vector<2x8x8xf32>
    "tpu.trace_start"() <{level = 10 : i32, message = "bqd,bkd->bqk"}> : () -> ()
    %cst_23 = arith.constant dense<0.000000e+00> : vector<2x8x8xf32>
    %57 = tpu.matmul %54, %55, %cst_23 {dimension_numbers = #tpu.dot_dimension_numbers<[2], [2], [1], [1], [0, 0, 0, 1, 1, 1], [0], [0]>} : vector<2x8x8xf32>, vector<2x8x8xf32>, vector<2x8x8xf32> -> vector<2x8x8xf32>
    "tpu.trace_stop"() : () -> ()
    %cst_24 = arith.constant 0.353553385 : f32
    %58 = vector.broadcast %cst_24 : f32 to vector<2x8x8xf32>
    %59 = arith.mulf %57, %58 : vector<2x8x8xf32>
    %60 = arith.addf %59, %36 : vector<2x8x8xf32>
    %cst_25 = arith.constant dense<0xFF800000> : vector<2x8xf32>
    %61 = vector.multi_reduction <maximumf>, %60, %cst_25 [2] : vector<2x8x8xf32> to vector<2x8xf32>
    %62 = vector.shape_cast %61 : vector<2x8xf32> to vector<2x8x1xf32>
    %63 = vector.broadcast %62 : vector<2x8x1xf32> to vector<2x8x8xf32>
    %64 = arith.subf %60, %63 : vector<2x8x8xf32>
    %65 = math.exp %64 : vector<2x8x8xf32>
    %cst_26 = arith.constant dense<0.000000e+00> : vector<2x8xf32>
    %66 = vector.multi_reduction <add>, %65, %cst_26 [2] : vector<2x8x8xf32> to vector<2x8xf32>
    %67 = vector.shape_cast %66 : vector<2x8xf32> to vector<2x8x1xf32>
    %68 = vector.broadcast %67 : vector<2x8x1xf32> to vector<2x8x8xf32>
    %69 = arith.divf %65, %68 : vector<2x8x8xf32>
    "tpu.trace_start"() <{level = 10 : i32, message = "bqk,bkd->bqd"}> : () -> ()
    %cst_27 = arith.constant dense<0.000000e+00> : vector<2x8x8xf32>
    %70 = tpu.matmul %69, %56, %cst_27 {dimension_numbers = #tpu.dot_dimension_numbers<[2], [1], [1], [2], [0, 0, 0, 1, 1, 2], [0], [0]>} : vector<2x8x8xf32>, vector<2x8x8xf32>, vector<2x8x8xf32> -> vector<2x8x8xf32>
    "tpu.trace_stop"() : () -> ()
    %71 = vector.extract_strided_slice %33 {offsets = [0, 0, 16], sizes = [2, 8, 8], strides = [1, 1, 1]} : vector<2x8x96xf32> to vector<2x8x8xf32>
    %72 = vector.extract_strided_slice %33 {offsets = [0, 0, 48], sizes = [2, 8, 8], strides = [1, 1, 1]} : vector<2x8x96xf32> to vector<2x8x8xf32>
    %73 = vector.extract_strided_slice %33 {offsets = [0, 0, 80], sizes = [2, 8, 8], strides = [1, 1, 1]} : vector<2x8x96xf32> to vector<2x8x8xf32>
    "tpu.trace_start"() <{level = 10 : i32, message = "bqd,bkd->bqk"}> : () -> ()
    %cst_28 = arith.constant dense<0.000000e+00> : vector<2x8x8xf32>
    %74 = tpu.matmul %71, %72, %cst_28 {dimension_numbers = #tpu.dot_dimension_numbers<[2], [2], [1], [1], [0, 0, 0, 1, 1, 1], [0], [0]>} : vector<2x8x8xf32>, vector<2x8x8xf32>, vector<2x8x8xf32> -> vector<2x8x8xf32>
    "tpu.trace_stop"() : () -> ()
    %cst_29 = arith.constant 0.353553385 : f32
    %75 = vector.broadcast %cst_29 : f32 to vector<2x8x8xf32>
    %76 = arith.mulf %74, %75 : vector<2x8x8xf32>
    %77 = arith.addf %76, %36 : vector<2x8x8xf32>
    %cst_30 = arith.constant dense<0xFF800000> : vector<2x8xf32>
    %78 = vector.multi_reduction <maximumf>, %77, %cst_30 [2] : vector<2x8x8xf32> to vector<2x8xf32>
    %79 = vector.shape_cast %78 : vector<2x8xf32> to vector<2x8x1xf32>
    %80 = vector.broadcast %79 : vector<2x8x1xf32> to vector<2x8x8xf32>
    %81 = arith.subf %77, %80 : vector<2x8x8xf32>
    %82 = math.exp %81 : vector<2x8x8xf32>
    %cst_31 = arith.constant dense<0.000000e+00> : vector<2x8xf32>
    %83 = vector.multi_reduction <add>, %82, %cst_31 [2] : vector<2x8x8xf32> to vector<2x8xf32>
    %84 = vector.shape_cast %83 : vector<2x8xf32> to vector<2x8x1xf32>
    %85 = vector.broadcast %84 : vector<2x8x1xf32> to vector<2x8x8xf32>
    %86 = arith.divf %82, %85 : vector<2x8x8xf32>
    "tpu.trace_start"() <{level = 10 : i32, message = "bqk,bkd->bqd"}> : () -> ()
    %cst_32 = arith.constant dense<0.000000e+00> : vector<2x8x8xf32>
    %87 = tpu.matmul %86, %73, %cst_32 {dimension_numbers = #tpu.dot_dimension_numbers<[2], [1], [1], [2], [0, 0, 0, 1, 1, 2], [0], [0]>} : vector<2x8x8xf32>, vector<2x8x8xf32>, vector<2x8x8xf32> -> vector<2x8x8xf32>
    "tpu.trace_stop"() : () -> ()
    %88 = vector.extract_strided_slice %33 {offsets = [0, 0, 24], sizes = [2, 8, 8], strides = [1, 1, 1]} : vector<2x8x96xf32> to vector<2x8x8xf32>
    %89 = vector.extract_strided_slice %33 {offsets = [0, 0, 56], sizes = [2, 8, 8], strides = [1, 1, 1]} : vector<2x8x96xf32> to vector<2x8x8xf32>
    %90 = vector.extract_strided_slice %33 {offsets = [0, 0, 88], sizes = [2, 8, 8], strides = [1, 1, 1]} : vector<2x8x96xf32> to vector<2x8x8xf32>
    "tpu.trace_start"() <{level = 10 : i32, message = "bqd,bkd->bqk"}> : () -> ()
    %cst_33 = arith.constant dense<0.000000e+00> : vector<2x8x8xf32>
    %91 = tpu.matmul %88, %89, %cst_33 {dimension_numbers = #tpu.dot_dimension_numbers<[2], [2], [1], [1], [0, 0, 0, 1, 1, 1], [0], [0]>} : vector<2x8x8xf32>, vector<2x8x8xf32>, vector<2x8x8xf32> -> vector<2x8x8xf32>
    "tpu.trace_stop"() : () -> ()
    %cst_34 = arith.constant 0.353553385 : f32
    %92 = vector.broadcast %cst_34 : f32 to vector<2x8x8xf32>
    %93 = arith.mulf %91, %92 : vector<2x8x8xf32>
    %94 = arith.addf %93, %36 : vector<2x8x8xf32>
    %cst_35 = arith.constant dense<0xFF800000> : vector<2x8xf32>
    %95 = vector.multi_reduction <maximumf>, %94, %cst_35 [2] : vector<2x8x8xf32> to vector<2x8xf32>
    %96 = vector.shape_cast %95 : vector<2x8xf32> to vector<2x8x1xf32>
    %97 = vector.broadcast %96 : vector<2x8x1xf32> to vector<2x8x8xf32>
    %98 = arith.subf %94, %97 : vector<2x8x8xf32>
    %99 = math.exp %98 : vector<2x8x8xf32>
    %cst_36 = arith.constant dense<0.000000e+00> : vector<2x8xf32>
    %100 = vector.multi_reduction <add>, %99, %cst_36 [2] : vector<2x8x8xf32> to vector<2x8xf32>
    %101 = vector.shape_cast %100 : vector<2x8xf32> to vector<2x8x1xf32>
    %102 = vector.broadcast %101 : vector<2x8x1xf32> to vector<2x8x8xf32>
    %103 = arith.divf %99, %102 : vector<2x8x8xf32>
    "tpu.trace_start"() <{level = 10 : i32, message = "bqk,bkd->bqd"}> : () -> ()
    %cst_37 = arith.constant dense<0.000000e+00> : vector<2x8x8xf32>
    %104 = tpu.matmul %103, %90, %cst_37 {dimension_numbers = #tpu.dot_dimension_numbers<[2], [1], [1], [2], [0, 0, 0, 1, 1, 2], [0], [0]>} : vector<2x8x8xf32>, vector<2x8x8xf32>, vector<2x8x8xf32> -> vector<2x8x8xf32>
    "tpu.trace_stop"() : () -> ()
    %105 = tpu.concatenate %53, %70, %87, %104 in 2 : vector<2x8x8xf32>, vector<2x8x8xf32>, vector<2x8x8xf32>, vector<2x8x8xf32> -> vector<2x8x32xf32>
    %106 = vector.shape_cast %105 : vector<2x8x32xf32> to vector<16x32xf32>
    %c0_38 = arith.constant 0 : index
    %c0_39 = arith.constant 0 : index
    %107 = vector.load %arg7[%c0_38, %c0_39] : memref<32x32xf32, #tpu.memory_space<vmem>>, vector<32x32xf32>
    %cst_40 = arith.constant dense<0.000000e+00> : vector<16x32xf32>
    %108 = tpu.matmul %106, %107, %cst_40 {dimension_numbers = #tpu.dot_dimension_numbers<[1], [0], [0], [1], [0, 0, 1, 1], [], []>} : vector<16x32xf32>, vector<32x32xf32>, vector<16x32xf32> -> vector<16x32xf32>
    %c0_41 = arith.constant 0 : index
    %c0_42 = arith.constant 0 : index
    %109 = vector.load %arg8[%c0_41, %c0_42] : memref<1x32xf32, #tpu.memory_space<vmem>>, vector<1x32xf32>
    %110 = vector.broadcast %109 : vector<1x32xf32> to vector<16x32xf32>
    %111 = arith.addf %108, %110 : vector<16x32xf32>
    %112 = arith.addf %111, %27 : vector<16x32xf32>
    %c0_43 = arith.constant 0 : index
    %c0_44 = arith.constant 0 : index
    %113 = vector.load %arg9[%c0_43, %c0_44] : memref<1x32xf32, #tpu.memory_space<vmem>>, vector<1x32xf32>
    %c0_45 = arith.constant 0 : index
    %c0_46 = arith.constant 0 : index
    %114 = vector.load %arg10[%c0_45, %c0_46] : memref<1x32xf32, #tpu.memory_space<vmem>>, vector<1x32xf32>
    %cst_47 = arith.constant dense<0.000000e+00> : vector<16xf32>
    %115 = vector.multi_reduction <add>, %112, %cst_47 [1] : vector<16x32xf32> to vector<16xf32>
    %116 = vector.shape_cast %115 : vector<16xf32> to vector<16x1xf32>
    %cst_48 = arith.constant 3.200000e+01 : f32
    %117 = vector.broadcast %cst_48 : f32 to vector<16x1xf32>
    %118 = arith.divf %116, %117 : vector<16x1xf32>
    %119 = vector.broadcast %118 : vector<16x1xf32> to vector<16x32xf32>
    %120 = arith.subf %112, %119 : vector<16x32xf32>
    %121 = vector.broadcast %118 : vector<16x1xf32> to vector<16x32xf32>
    %122 = arith.subf %112, %121 : vector<16x32xf32>
    %123 = arith.mulf %120, %122 : vector<16x32xf32>
    %cst_49 = arith.constant dense<0.000000e+00> : vector<16xf32>
    %124 = vector.multi_reduction <add>, %123, %cst_49 [1] : vector<16x32xf32> to vector<16xf32>
    %125 = vector.shape_cast %124 : vector<16xf32> to vector<16x1xf32>
    %cst_50 = arith.constant 3.200000e+01 : f32
    %126 = vector.broadcast %cst_50 : f32 to vector<16x1xf32>
    %127 = arith.divf %125, %126 : vector<16x1xf32>
    %128 = vector.broadcast %118 : vector<16x1xf32> to vector<16x32xf32>
    %129 = arith.subf %112, %128 : vector<16x32xf32>
    %cst_51 = arith.constant 9.99999996E-13 : f32
    %130 = vector.broadcast %cst_51 : f32 to vector<16x1xf32>
    %131 = arith.addf %127, %130 : vector<16x1xf32>
    %132 = math.rsqrt %131 : vector<16x1xf32>
    %133 = vector.broadcast %132 : vector<16x1xf32> to vector<16x32xf32>
    %134 = arith.mulf %129, %133 : vector<16x32xf32>
    %135 = vector.broadcast %113 : vector<1x32xf32> to vector<16x32xf32>
    %136 = arith.mulf %134, %135 : vector<16x32xf32>
    %137 = vector.broadcast %114 : vector<1x32xf32> to vector<16x32xf32>
    %138 = arith.addf %136, %137 : vector<16x32xf32>
    %c0_52 = arith.constant 0 : index
    %c0_53 = arith.constant 0 : index
    %139 = vector.load %arg11[%c0_52, %c0_53] : memref<32x64xf32, #tpu.memory_space<vmem>>, vector<32x64xf32>
    %cst_54 = arith.constant dense<0.000000e+00> : vector<16x64xf32>
    %140 = tpu.matmul %138, %139, %cst_54 {dimension_numbers = #tpu.dot_dimension_numbers<[1], [0], [0], [1], [0, 0, 1, 1], [], []>} : vector<16x32xf32>, vector<32x64xf32>, vector<16x64xf32> -> vector<16x64xf32>
    %c0_55 = arith.constant 0 : index
    %c0_56 = arith.constant 0 : index
    %141 = vector.load %arg12[%c0_55, %c0_56] : memref<1x64xf32, #tpu.memory_space<vmem>>, vector<1x64xf32>
    %142 = vector.broadcast %141 : vector<1x64xf32> to vector<16x64xf32>
    %143 = arith.addf %140, %142 : vector<16x64xf32>
    %cst_57 = arith.constant 5.000000e-01 : f32
    %144 = vector.broadcast %cst_57 : f32 to vector<16x64xf32>
    %145 = arith.mulf %144, %143 : vector<16x64xf32>
    %cst_58 = arith.constant 4.471500e-02 : f32
    %146 = vector.broadcast %cst_58 : f32 to vector<16x64xf32>
    %147 = arith.mulf %146, %143 : vector<16x64xf32>
    %148 = arith.mulf %147, %143 : vector<16x64xf32>
    %149 = arith.mulf %148, %143 : vector<16x64xf32>
    %150 = arith.addf %143, %149 : vector<16x64xf32>
    %cst_59 = arith.constant 0.797884583 : f32
    %151 = vector.broadcast %cst_59 : f32 to vector<16x64xf32>
    %152 = arith.mulf %151, %150 : vector<16x64xf32>
    %153 = math.tanh %152 : vector<16x64xf32>
    %cst_60 = arith.constant 1.000000e+00 : f32
    %154 = vector.broadcast %cst_60 : f32 to vector<16x64xf32>
    %155 = arith.addf %154, %153 : vector<16x64xf32>
    %156 = arith.mulf %145, %155 : vector<16x64xf32>
    %c0_61 = arith.constant 0 : index
    %c0_62 = arith.constant 0 : index
    %157 = vector.load %arg13[%c0_61, %c0_62] : memref<64x32xf32, #tpu.memory_space<vmem>>, vector<64x32xf32>
    %cst_63 = arith.constant dense<0.000000e+00> : vector<16x32xf32>
    %158 = tpu.matmul %156, %157, %cst_63 {dimension_numbers = #tpu.dot_dimension_numbers<[1], [0], [0], [1], [0, 0, 1, 1], [], []>} : vector<16x64xf32>, vector<64x32xf32>, vector<16x32xf32> -> vector<16x32xf32>
    %c0_64 = arith.constant 0 : index
    %c0_65 = arith.constant 0 : index
    %159 = vector.load %arg14[%c0_64, %c0_65] : memref<1x32xf32, #tpu.memory_space<vmem>>, vector<1x32xf32>
    %160 = vector.broadcast %159 : vector<1x32xf32> to vector<16x32xf32>
    %161 = arith.addf %158, %160 : vector<16x32xf32>
    %162 = arith.addf %161, %138 : vector<16x32xf32>
    %c0_66 = arith.constant 0 : index
    %c0_67 = arith.constant 0 : index
    %163 = vector.load %arg15[%c0_66, %c0_67] : memref<1x32xf32, #tpu.memory_space<vmem>>, vector<1x32xf32>
    %c0_68 = arith.constant 0 : index
    %c0_69 = arith.constant 0 : index
    %164 = vector.load %arg16[%c0_68, %c0_69] : memref<1x32xf32, #tpu.memory_space<vmem>>, vector<1x32xf32>
    %cst_70 = arith.constant dense<0.000000e+00> : vector<16xf32>
    %165 = vector.multi_reduction <add>, %162, %cst_70 [1] : vector<16x32xf32> to vector<16xf32>
    %166 = vector.shape_cast %165 : vector<16xf32> to vector<16x1xf32>
    %cst_71 = arith.constant 3.200000e+01 : f32
    %167 = vector.broadcast %cst_71 : f32 to vector<16x1xf32>
    %168 = arith.divf %166, %167 : vector<16x1xf32>
    %169 = vector.broadcast %168 : vector<16x1xf32> to vector<16x32xf32>
    %170 = arith.subf %162, %169 : vector<16x32xf32>
    %171 = vector.broadcast %168 : vector<16x1xf32> to vector<16x32xf32>
    %172 = arith.subf %162, %171 : vector<16x32xf32>
    %173 = arith.mulf %170, %172 : vector<16x32xf32>
    %cst_72 = arith.constant dense<0.000000e+00> : vector<16xf32>
    %174 = vector.multi_reduction <add>, %173, %cst_72 [1] : vector<16x32xf32> to vector<16xf32>
    %175 = vector.shape_cast %174 : vector<16xf32> to vector<16x1xf32>
    %cst_73 = arith.constant 3.200000e+01 : f32
    %176 = vector.broadcast %cst_73 : f32 to vector<16x1xf32>
    %177 = arith.divf %175, %176 : vector<16x1xf32>
    %178 = vector.broadcast %168 : vector<16x1xf32> to vector<16x32xf32>
    %179 = arith.subf %162, %178 : vector<16x32xf32>
    %cst_74 = arith.constant 9.99999996E-13 : f32
    %180 = vector.broadcast %cst_74 : f32 to vector<16x1xf32>
    %181 = arith.addf %177, %180 : vector<16x1xf32>
    %182 = math.rsqrt %181 : vector<16x1xf32>
    %183 = vector.broadcast %182 : vector<16x1xf32> to vector<16x32xf32>
    %184 = arith.mulf %179, %183 : vector<16x32xf32>
    %185 = vector.broadcast %163 : vector<1x32xf32> to vector<16x32xf32>
    %186 = arith.mulf %184, %185 : vector<16x32xf32>
    %187 = vector.broadcast %164 : vector<1x32xf32> to vector<16x32xf32>
    %188 = arith.addf %186, %187 : vector<16x32xf32>
    %189 = vector.shape_cast %188 : vector<16x32xf32> to vector<2x8x32xf32>
    %c0_75 = arith.constant 0 : index
    %c0_76 = arith.constant 0 : index
    %c0_77 = arith.constant 0 : index
    %190 = vector.load %arg17[%c0_75, %c0_76, %c0_77] : memref<2x8x32xf32, #tpu.memory_space<vmem>>, vector<2x8x32xf32>
    tpu.vector_store %arg17[%c0_75, %c0_76, %c0_77], %189 {strides = array<i32>} : memref<2x8x32xf32, #tpu.memory_space<vmem>>, vector<2x8x32xf32>,
    return
  }
  func.func @transform_0(%arg0: i32) -> (i32, i32, i32) {
    %c0_i32 = arith.constant 0 : i32
    %c0_i32_0 = arith.constant 0 : i32
    %c0_i32_1 = arith.constant 0 : i32
    return %arg0, %c0_i32, %c0_i32_0 : i32, i32, i32
  }
  func.func @transform_1(%arg0: i32) -> (i32, i32, i32) {
    %c0_i32 = arith.constant 0 : i32
    %c0_i32_0 = arith.constant 0 : i32
    %c0_i32_1 = arith.constant 0 : i32
    return %arg0, %c0_i32, %c0_i32_0 : i32, i32, i32
  }
  func.func @transform_2(%arg0: i32) -> (i32, i32) {
    %c0_i32 = arith.constant 0 : i32
    %c0_i32_0 = arith.constant 0 : i32
    %c0_i32_1 = arith.constant 0 : i32
    return %c0_i32, %c0_i32_0 : i32, i32
  }
  func.func @transform_3(%arg0: i32) -> (i32, i32) {
    %c0_i32 = arith.constant 0 : i32
    %c0_i32_0 = arith.constant 0 : i32
    %c0_i32_1 = arith.constant 0 : i32
    return %c0_i32, %c0_i32_0 : i32, i32
  }
  func.func @transform_4(%arg0: i32) -> (i32, i32) {
    %c0_i32 = arith.constant 0 : i32
    %c0_i32_0 = arith.constant 0 : i32
    %c0_i32_1 = arith.constant 0 : i32
    return %c0_i32, %c0_i32_0 : i32, i32
  }
  func.func @transform_5(%arg0: i32) -> (i32, i32) {
    %c0_i32 = arith.constant 0 : i32
    %c0_i32_0 = arith.constant 0 : i32
    %c0_i32_1 = arith.constant 0 : i32
    return %c0_i32, %c0_i32_0 : i32, i32
  }
  func.func @transform_6(%arg0: i32) -> (i32, i32) {
    %c0_i32 = arith.constant 0 : i32
    %c0_i32_0 = arith.constant 0 : i32
    %c0_i32_1 = arith.constant 0 : i32
    return %c0_i32, %c0_i32_0 : i32, i32
  }
  func.func @transform_7(%arg0: i32) -> (i32, i32) {
    %c0_i32 = arith.constant 0 : i32
    %c0_i32_0 = arith.constant 0 : i32
    %c0_i32_1 = arith.constant 0 : i32
    return %c0_i32, %c0_i32_0 : i32, i32
  }
  func.func @transform_8(%arg0: i32) -> (i32, i32) {
    %c0_i32 = arith.constant 0 : i32
    %c0_i32_0 = arith.constant 0 : i32
    %c0_i32_1 = arith.constant 0 : i32
    return %c0_i32, %c0_i32_0 : i32, i32
  }
  func.func @transform_9(%arg0: i32) -> (i32, i32) {
    %c0_i32 = arith.constant 0 : i32
    %c0_i32_0 = arith.constant 0 : i32
    %c0_i32_1 = arith.constant 0 : i32
    return %c0_i32, %c0_i32_0 : i32, i32
  }
  func.func @transform_10(%arg0: i32) -> (i32, i32) {
    %c0_i32 = arith.constant 0 : i32
    %c0_i32_0 = arith.constant 0 : i32
    %c0_i32_1 = arith.constant 0 : i32
    return %c0_i32, %c0_i32_0 : i32, i32
  }
  func.func @transform_11(%arg0: i32) -> (i32, i32) {
    %c0_i32 = arith.constant 0 : i32
    %c0_i32_0 = arith.constant 0 : i32
    %c0_i32_1 = arith.constant 0 : i32
    return %c0_i32, %c0_i32_0 : i32, i32
  }
  func.func @transform_12(%arg0: i32) -> (i32, i32) {
    %c0_i32 = arith.constant 0 : i32
    %c0_i32_0 = arith.constant 0 : i32
    %c0_i32_1 = arith.constant 0 : i32
    return %c0_i32, %c0_i32_0 : i32, i32
  }
  func.func @transform_13(%arg0: i32) -> (i32, i32) {
    %c0_i32 = arith.constant 0 : i32
    %c0_i32_0 = arith.constant 0 : i32
    %c0_i32_1 = arith.constant 0 : i32
    return %c0_i32, %c0_i32_0 : i32, i32
  }
  func.func @transform_14(%arg0: i32) -> (i32, i32) {
    %c0_i32 = arith.constant 0 : i32
    %c0_i32_0 = arith.constant 0 : i32
    %c0_i32_1 = arith.constant 0 : i32
    return %c0_i32, %c0_i32_0 : i32, i32
  }
  func.func @transform_15(%arg0: i32) -> (i32, i32) {
    %c0_i32 = arith.constant 0 : i32
    %c0_i32_0 = arith.constant 0 : i32
    %c0_i32_1 = arith.constant 0 : i32
    return %c0_i32, %c0_i32_0 : i32, i32
  }
  func.func @transform_16(%arg0: i32) -> (i32, i32, i32) {
    %c0_i32 = arith.constant 0 : i32
    %c0_i32_0 = arith.constant 0 : i32
    %c0_i32_1 = arith.constant 0 : i32
    return %arg0, %c0_i32, %c0_i32_0 : i32, i32, i32
  }
}

</mosaic_0001>

<llo_original>
// kernel: tpu_custom_call.1
$region0: #{tpu_custom_call.1}
  #allocation0 [shape = 'u32[]', space=smem, size = 0x4, offset = 0x4, fixed_abs, tag = 'smem constant byte address 0x4 - core index']
  #allocation1 [shape = 'u32[144,128]{1,0:T(1,128)}', space=vmem, size = 0x12000, scoped, tag = 'internal scratch']
  %s0 = inlined_call_operand.hbm [shape: f32[2,8,32], index: 0, kind: input, shape index: {}]
  %s1 = inlined_call_operand.vmem [shape: f32[2,1,8], index: 1, kind: input, shape index: {}]
  %s2 = inlined_call_operand.vmem [shape: f32[1,32], index: 2, kind: input, shape index: {}]
  %s3 = inlined_call_operand.vmem [shape: f32[1,32], index: 3, kind: input, shape index: {}]
  %s4 = inlined_call_operand.vmem [shape: f32[32,96], index: 4, kind: input, shape index: {}]
  %s5 = inlined_call_operand.vmem [shape: f32[1,96], index: 5, kind: input, shape index: {}]
  %s6 = inlined_call_operand.vmem [shape: f32[32,32], index: 6, kind: input, shape index: {}]
  %s7 = inlined_call_operand.vmem [shape: f32[1,32], index: 7, kind: input, shape index: {}]
  %s8 = inlined_call_operand.vmem [shape: f32[1,32], index: 8, kind: input, shape index: {}]
  %s9 = inlined_call_operand.vmem [shape: f32[1,32], index: 9, kind: input, shape index: {}]
  %s10 = inlined_call_operand.vmem [shape: f32[32,64], index: 10, kind: input, shape index: {}]
  %s11 = inlined_call_operand.vmem [shape: f32[1,64], index: 11, kind: input, shape index: {}]
  %s12 = inlined_call_operand.vmem [shape: f32[64,32], index: 12, kind: input, shape index: {}]
  %s13 = inlined_call_operand.vmem [shape: f32[1,32], index: 13, kind: input, shape index: {}]
  %s14 = inlined_call_operand.vmem [shape: f32[1,32], index: 14, kind: input, shape index: {}]
  %s15 = inlined_call_operand.vmem [shape: f32[1,32], index: 15, kind: input, shape index: {}]
  %s16 = inlined_call_operand.hbm [shape: f32[2,8,32], index: 16, kind: output, shape index: {}]
  %s17 = sld [smem:[#allocation0]]
  $region78: #{tpu_custom_call.1} parent=0
    _
  %s19 = ssub.s32 1, %s17
  %s20 = scalar_select 0, %s19, %s17
  $region1: #{tpu_custom_call.1} parent=0
    #allocation2 [shape = 'u8[8192]{0}', space=vmem, size = 0x2000, scoped, tag = 'input window, operand 0, single buffered']
    #allocation3 [shape = 's32[1]{0}', space=sflag, size = 0x4, scoped, tag = 'scoped memory for tpu_custom_call.1']
    #allocation4 [shape = 's32[1]{0}', space=sflag, size = 0x4, scoped, tag = 'scoped memory for tpu_custom_call.1']
    #allocation5 [shape = 'u8[8192]{0}', space=vmem, size = 0x2000, scoped, tag = 'output window, operand 0, single buffered']
    %21 = vsyncpa [#allocation3], 0
    %22 = vsyncpa [#allocation4], 0
    // Predicated region
    $region2: #{tpu_custom_call.1} parent=1 // pred_check
      _
    $region3: #{tpu_custom_call.1} parent=1 // pred_check_branch
      %24 = sbr.rel (0) target = $region5
    $region4: #{tpu_custom_call.1} parent=1 // pred_region
      %s26 = ssub.s32 256, 256
      %27 = vsyncadd [#allocation3], %s26
      %s28 = sshll.u32 [#allocation2], 4
      %s29 = int_to_ptr.vmem [resolvable:$true] %s28
      %34 = dma.hbm_to_vmem [thread:$0]  %s0, 256, %s29, [#allocation3], 128, 128, 8
    $region5: #{tpu_custom_call.1} parent=1 // pred_fallthru
      _
    // Predicated region
    $region6: #{tpu_custom_call.1} parent=1 // pred_check
      _
    $region7: #{tpu_custom_call.1} parent=1 // pred_check_branch
      %36 = sbr.rel (0) target = $region9
    $region8: #{tpu_custom_call.1} parent=1 // pred_region
      _
    $region9: #{tpu_custom_call.1} parent=1 // pred_fallthru
      _
    // Predicated region
    $region10: #{tpu_custom_call.1} parent=1 // pred_check
      _
    $region11: #{tpu_custom_call.1} parent=1 // pred_check_branch
      %38 = sbr.rel (0) target = $region13
    $region12: #{tpu_custom_call.1} parent=1 // pred_region
      _
    $region13: #{tpu_custom_call.1} parent=1 // pred_fallthru
      _
    // Predicated region
    $region14: #{tpu_custom_call.1} parent=1 // pred_check
      _
    $region15: #{tpu_custom_call.1} parent=1 // pred_check_branch
      %40 = sbr.rel (0) target = $region17
    $region16: #{tpu_custom_call.1} parent=1 // pred_region
      _
    $region17: #{tpu_custom_call.1} parent=1 // pred_fallthru
      _
    // Predicated region
    $region18: #{tpu_custom_call.1} parent=1 // pred_check
      _
    $region19: #{tpu_custom_call.1} parent=1 // pred_check_branch
      %42 = sbr.rel (0) target = $region21
    $region20: #{tpu_custom_call.1} parent=1 // pred_region
      _
    $region21: #{tpu_custom_call.1} parent=1 // pred_fallthru
      _
    // Predicated region
    $region22: #{tpu_custom_call.1} parent=1 // pred_check
      _
    $region23: #{tpu_custom_call.1} parent=1 // pred_check_branch
      %44 = sbr.rel (0) target = $region25
    $region24: #{tpu_custom_call.1} parent=1 // pred_region
      _
    $region25: #{tpu_custom_call.1} parent=1 // pred_fallthru
      _
    // Predicated region
    $region26: #{tpu_custom_call.1} parent=1 // pred_check
      _
    $region27: #{tpu_custom_call.1} parent=1 // pred_check_branch
      %46 = sbr.rel (0) target = $region29
    $region28: #{tpu_custom_call.1} parent=1 // pred_region
      _
    $region29: #{tpu_custom_call.1} parent=1 // pred_fallthru
      _
    // Predicated region
    $region30: #{tpu_custom_call.1} parent=1 // pred_check
      _
    $region31: #{tpu_custom_call.1} parent=1 // pred_check_branch
      %48 = sbr.rel (0) target = $region33
    $region32: #{tpu_custom_call.1} parent=1 // pred_region
      _
    $region33: #{tpu_custom_call.1} parent=1 // pred_fallthru
      _
    // Predicated region
    $region34: #{tpu_custom_call.1} parent=1 // pred_check
      _
    $region35: #{tpu_custom_call.1} parent=1 // pred_check_branch
      %50 = sbr.rel (0) target = $region37
    $region36: #{tpu_custom_call.1} parent=1 // pred_region
      _
    $region37: #{tpu_custom_call.1} parent=1 // pred_fallthru
      _
    // Predicated region
    $region38: #{tpu_custom_call.1} parent=1 // pred_check
      _
    $region39: #{tpu_custom_call.1} parent=1 // pred_check_branch
      %52 = sbr.rel (0) target = $region41
    $region40: #{tpu_custom_call.1} parent=1 // pred_region
      _
    $region41: #{tpu_custom_call.1} parent=1 // pred_fallthru
      _
    // Predicated region
    $region42: #{tpu_custom_call.1} parent=1 // pred_check
      _
    $region43: #{tpu_custom_call.1} parent=1 // pred_check_branch
      %54 = sbr.rel (0) target = $region45
    $region44: #{tpu_custom_call.1} parent=1 // pred_region
      _
    $region45: #{tpu_custom_call.1} parent=1 // pred_fallthru
      _
    // Predicated region
    $region46: #{tpu_custom_call.1} parent=1 // pred_check
      _
    $region47: #{tpu_custom_call.1} parent=1 // pred_check_branch
      %56 = sbr.rel (0) target = $region49
    $region48: #{tpu_custom_call.1} parent=1 // pred_region
      _
    $region49: #{tpu_custom_call.1} parent=1 // pred_fallthru
      _
    // Predicated region
    $region50: #{tpu_custom_call.1} parent=1 // pred_check
      _
    $region51: #{tpu_custom_call.1} parent=1 // pred_check_branch
      %58 = sbr.rel (0) target = $region53
    $region52: #{tpu_custom_call.1} parent=1 // pred_region
      _
    $region53: #{tpu_custom_call.1} parent=1 // pred_fallthru
      _
    // Predicated region
    $region54: #{tpu_custom_call.1} parent=1 // pred_check
      _
    $region55: #{tpu_custom_call.1} parent=1 // pred_check_branch
      %60 = sbr.rel (0) target = $region57
    $region56: #{tpu_custom_call.1} parent=1 // pred_region
      _
    $region57: #{tpu_custom_call.1} parent=1 // pred_fallthru
      _
    // Predicated region
    $region58: #{tpu_custom_call.1} parent=1 // pred_check
      _
    $region59: #{tpu_custom_call.1} parent=1 // pred_check_branch
      %62 = sbr.rel (0) target = $region61
    $region60: #{tpu_custom_call.1} parent=1 // pred_region
      _
    $region61: #{tpu_custom_call.1} parent=1 // pred_fallthru
      _
    // Predicated region
    $region62: #{tpu_custom_call.1} parent=1 // pred_check
      _
    $region63: #{tpu_custom_call.1} parent=1 // pred_check_branch
      %64 = sbr.rel (0) target = $region65
    $region64: #{tpu_custom_call.1} parent=1 // pred_region
      _
    $region65: #{tpu_custom_call.1} parent=1 // pred_fallthru
      _
    // Predicated region
    $region66: #{tpu_custom_call.1} parent=1 // pred_check
      _
    $region67: #{tpu_custom_call.1} parent=1 // pred_check_branch
      %66 = sbr.rel (0) target = $region69
    $region68: #{tpu_custom_call.1} parent=1 // pred_region
      %67 = dma.done [#allocation3], 256
    $region69: #{tpu_custom_call.1} parent=1 // pred_fallthru
      _
    %v68 = vld [vmem:[#allocation2] sm:$0xff]
    %v69 = vld [vmem:[#allocation2 + $0x8] sm:$0xff]
    %v70 = vld [vmem:[%s2] sm:$0x1]
    %v71 = vld [vmem:[%s3] sm:$0x1]
    %vm72 = vcmask 261120
    %v73 = vsel %vm72, %v68, 0.0
    %74 = vadd.xlane.f32.xlu0 %v73
    %v75 = vpop.xlane.xlu0 %74
    %v76 = vsel %vm72, %v69, 0.0
    %77 = vadd.xlane.f32.xlu0 %v76
    %v78 = vpop.xlane.xlu0 %77
    %v79 = vrcp.pop 32.0
    %v80 = vmul.f32 %v75, %v79
    %v81 = vmul.f32 %v78, %v79
    %v82 = vsub.f32 %v68, %v80
    %v83 = vsub.f32 %v69, %v81
    %v84 = vmul.f32 %v82, %v82
    %v85 = vmul.f32 %v83, %v83
    %v86 = vsel %vm72, %v84, 0.0
    %87 = vadd.xlane.f32.xlu0 %v86
    %v88 = vpop.xlane.xlu0 %87
    %v89 = vsel %vm72, %v85, 0.0
    %90 = vadd.xlane.f32.xlu0 %v89
    %v91 = vpop.xlane.xlu0 %90
    %v92 = vmul.f32 %v88, %v79
    %v93 = vmul.f32 %v91, %v79
    %v94 = vadd.f32 %v92, 1e-12
    %v95 = vadd.f32 %v93, 1e-12
    %v96 = vrsqrt.pop %v94
    %v97 = vrsqrt.pop %v95
    %v98 = vmul.f32 %v82, %v96
    %v99 = vmul.f32 %v83, %v97
    %v101 = vlaneseq
    %v102 = vshrl.u32 %v101, 7
    %v103 = vsub.s32 0, %v102
    %v104 = vrot.slane %v70, %v103
    %v106 = vmul.f32 %v98, %v104
    %v107 = vmul.f32 %v99, %v104
    %v109 = vlaneseq
    %v110 = vshrl.u32 %v109, 7
    %v111 = vsub.s32 0, %v110
    %v112 = vrot.slane %v71, %v111
    %v114 = vadd.f32 %v106, %v112
    %v115 = vadd.f32 %v107, %v112
    %v116 = vld [vmem:[%s4] sm:$0xff]
    %v117 = vld [vmem:[%s4 + $0x8] sm:$0xff]
    %v118 = vld [vmem:[%s4 + $0x10] sm:$0xff]
    %v119 = vld [vmem:[%s4 + $0x18] sm:$0xff]
    %v120 = vld [vmem:[%s5] sm:$0x1]
    %v122 = vlaneseq
    %v123 = vshrl.u32 %v122, 7
    %v124 = vsub.s32 0, %v123
    %v125 = vrot.slane %v120, %v124
    %v128 = vsel %vm72, %v114, 0
    %v131 = vsel %vm72, %v115, 0
    %133 = vmatprep.subr.mxu0 0.0
    %134 = vmatpush1.msra.mxu0 %v116
    %135 = vmatprep.subr.mxu0 0.0
    %136 = vmatpush1.msra.mxu0 %v117
    %137 = vmatprep.subr.mxu0 0.0
    %138 = vmatpush1.msra.mxu0 %v118
    %139 = vmatprep.subr.mxu0 0.0
    %140 = vmatpush1.msra.mxu0 %v119
    %141 = vmatprep.subr.mxu0 0.0
    %142 = vmatpush1.msra.mxu0 0.0
    %143 = vmatprep.subr.mxu0 0.0
    %144 = vmatpush1.msra.mxu0 0.0
    %145 = vmatprep.subr.mxu0 0.0
    %146 = vmatpush1.msra.mxu0 0.0
    %147 = vmatprep.subr.mxu0 0.0
    %148 = vmatpush1.msra.mxu0 0.0
    %149 = vmatprep.subr.mxu0 0.0
    %150 = vmatpush1.msra.mxu0 0.0
    %151 = vmatprep.subr.mxu0 0.0
    %152 = vmatpush1.msra.mxu0 0.0
    %153 = vmatprep.subr.mxu0 0.0
    %154 = vmatpush1.msra.mxu0 0.0
    %155 = vmatprep.subr.mxu0 0.0
    %156 = vmatpush1.msra.mxu0 0.0
    %157 = vmatprep.subr.mxu0 0.0
    %158 = vmatpush1.msra.mxu0 0.0
    %159 = vmatprep.subr.mxu0 0.0
    %160 = vmatpush1.msra.mxu0 0.0
    %161 = vmatprep.subr.mxu0 0.0
    %162 = vmatpush1.msra.mxu0 0.0
    %163 = vmatprep.subr.mxu0 0.0
    %164 = vmatpush1.msra.mxu0 0.0
    %165 = vmatprep.subr.mxu0 0.0
    %166 = vmatpush1.msra.mxu0 0.0
    %167 = vmatprep.subr.mxu0 0.0
    %168 = vmatpush1.msra.mxu0 0.0
    %169 = vmatprep.subr.mxu0 0.0
    %170 = vmatpush1.msra.mxu0 0.0
    %171 = vmatprep.subr.mxu0 0.0
    %172 = vmatpush1.msra.mxu0 0.0
    %173 = vmatprep.subr.mxu0 0.0
    %174 = vmatpush1.msra.mxu0 0.0
    %175 = vmatprep.subr.mxu0 0.0
    %176 = vmatpush1.msra.mxu0 0.0
    %177 = vmatprep.subr.mxu0 0.0
    %178 = vmatpush1.msra.mxu0 0.0
    %179 = vmatprep.subr.mxu0 0.0
    %180 = vmatpush1.msra.mxu0 0.0
    %181 = vmatprep.subr.mxu0 0.0
    %182 = vmatpush1.msra.mxu0 0.0
    %183 = vmatprep.subr.mxu0 0.0
    %184 = vmatpush1.msra.mxu0 0.0
    %185 = vmatprep.subr.mxu0 0.0
    %186 = vmatpush1.msra.mxu0 0.0
    %187 = vmatprep.subr.mxu0 0.0
    %188 = vmatpush1.msra.mxu0 0.0
    %189 = vmatprep.subr.mxu0 0.0
    %190 = vmatpush1.msra.mxu0 0.0
    %191 = vmatprep.subr.mxu0 0.0
    %192 = vmatpush1.msra.mxu0 0.0
    %193 = vmatprep.subr.mxu0 0.0
    %194 = vmatpush1.msra.mxu0 0.0
    %195 = vmatprep.subr.mxu0 0.0
    %196 = vmatpush1.msra.mxu0 0.0
    %197 = vmatprep.mubr.f32.mxu0 0.0
    %198 = vmatmul.mubr.f32.gmra.mrb[0].mxu0 %v128
    %v199 = vpop.f32.mrb[0].mxu0
    %v200 = vadd.f32 %v125, %v199
    %v201 = vpop.f32.mrb[0].mxu0
    %202 = vmatprep.mubr.f32.mxu0 0.0
    %203 = vmatmul.mubr.f32.gmra.mrb[0].mxu0 %v131
    %v204 = vpop.f32.mrb[0].mxu0
    %v205 = vadd.f32 %v125, %v204
    %v206 = vpop.f32.mrb[0].mxu0
    %207 = vdwg.mxu0
    %v208 = vld [vmem:[%s1] sm:$0x1]
    %v209 = vld [vmem:[%s1 + $0x1] sm:$0x1]
    %v212 = vlaneseq
    %v213 = vshrl.u32 %v212, 7
    %v214 = vsub.s32 0, %v213
    %v215 = vrot.slane %v208, %v214
    %v216 = vlaneseq
    %v217 = vshrl.u32 %v216, 7
    %v218 = vsub.s32 0, %v217
    %v219 = vrot.slane %v209, %v218
    %223 = vrot.lane.b32.xlu0 %v200, 96
    %v224 = vpop.permute.xlu0 %223
    %vm225 = vcmask 64512
    %v226 = vsel %vm225, %v200, 0
    %v228 = vsel %vm225, %v224, 0
    %230 = vmatprep.subr.mxu0 0.0
    %231 = vmatpush1.xpose.msra.mxu0 %v228
    %232 = vmatprep.subr.mxu0 0.0
    %233 = vmatpush1.xpose.msra.mxu0 0.0
    %234 = vmatprep.subr.mxu0 0.0
    %235 = vmatpush1.xpose.msra.mxu0 0.0
    %236 = vmatprep.subr.mxu0 0.0
    %237 = vmatpush1.xpose.msra.mxu0 0.0
    %238 = vmatprep.subr.mxu0 0.0
    %239 = vmatpush1.xpose.msra.mxu0 0.0
    %240 = vmatprep.subr.mxu0 0.0
    %241 = vmatpush1.xpose.msra.mxu0 0.0
    %242 = vmatprep.subr.mxu0 0.0
    %243 = vmatpush1.xpose.msra.mxu0 0.0
    %244 = vmatprep.subr.mxu0 0.0
    %245 = vmatpush1.xpose.msra.mxu0 0.0
    %246 = vmatprep.subr.mxu0 0.0
    %247 = vmatpush1.xpose.msra.mxu0 0.0
    %248 = vmatprep.subr.mxu0 0.0
    %249 = vmatpush1.xpose.msra.mxu0 0.0
    %250 = vmatprep.subr.mxu0 0.0
    %251 = vmatpush1.xpose.msra.mxu0 0.0
    %252 = vmatprep.subr.mxu0 0.0
    %253 = vmatpush1.xpose.msra.mxu0 0.0
    %254 = vmatprep.subr.mxu0 0.0
    %255 = vmatpush1.xpose.msra.mxu0 0.0
    %256 = vmatprep.subr.mxu0 0.0
    %257 = vmatpush1.xpose.msra.mxu0 0.0
    %258 = vmatprep.subr.mxu0 0.0
    %259 = vmatpush1.xpose.msra.mxu0 0.0
    %260 = vmatprep.subr.mxu0 0.0
    %261 = vmatpush1.xpose.msra.mxu0 0.0
    %262 = vmatprep.subr.mxu0 0.0
    %263 = vmatpush1.xpose.msra.mxu0 0.0
    %264 = vmatprep.subr.mxu0 0.0
    %265 = vmatpush1.xpose.msra.mxu0 0.0
    %266 = vmatprep.subr.mxu0 0.0
    %267 = vmatpush1.xpose.msra.mxu0 0.0
    %268 = vmatprep.subr.mxu0 0.0
    %269 = vmatpush1.xpose.msra.mxu0 0.0
    %270 = vmatprep.subr.mxu0 0.0
    %271 = vmatpush1.xpose.msra.mxu0 0.0
    %272 = vmatprep.subr.mxu0 0.0
    %273 = vmatpush1.xpose.msra.mxu0 0.0
    %274 = vmatprep.subr.mxu0 0.0
    %275 = vmatpush1.xpose.msra.mxu0 0.0
    %276 = vmatprep.subr.mxu0 0.0
    %277 = vmatpush1.xpose.msra.mxu0 0.0
    %278 = vmatprep.subr.mxu0 0.0
    %279 = vmatpush1.xpose.msra.mxu0 0.0
    %280 = vmatprep.subr.mxu0 0.0
    %281 = vmatpush1.xpose.msra.mxu0 0.0
    %282 = vmatprep.subr.mxu0 0.0
    %283 = vmatpush1.xpose.msra.mxu0 0.0
    %284 = vmatprep.subr.mxu0 0.0
    %285 = vmatpush1.xpose.msra.mxu0 0.0
    %286 = vmatprep.subr.mxu0 0.0
    %287 = vmatpush1.xpose.msra.mxu0 0.0
    %288 = vmatprep.subr.mxu0 0.0
    %289 = vmatpush1.xpose.msra.mxu0 0.0
    %290 = vmatprep.subr.mxu0 0.0
    %291 = vmatpush1.xpose.msra.mxu0 0.0
    %292 = vmatprep.subr.mxu0 0.0
    %293 = vmatpush1.xpose.msra.mxu0 0.0
    %294 = vmatprep.mubr.f32.mxu0 0.0
    %295 = vmatmul.mubr.f32.gmra.mrb[0].mxu0 %v226
    %v296 = vpop.f32.mrb[0].mxu0
    %v297 = vadd.f32 0.0, %v296
    %v298 = vpop.f32.mrb[0].mxu0
    %299 = vdwg.mxu0
    %301 = vrot.lane.b32.xlu0 %v205, 96
    %v302 = vpop.permute.xlu0 %301
    %v303 = vsel %vm225, %v205, 0
    %v305 = vsel %vm225, %v302, 0
    %307 = vmatprep.subr.mxu0 0.0
    %308 = vmatpush1.xpose.msra.mxu0 %v305
    %309 = vmatprep.subr.mxu0 0.0
    %310 = vmatpush1.xpose.msra.mxu0 0.0
    %311 = vmatprep.subr.mxu0 0.0
    %312 = vmatpush1.xpose.msra.mxu0 0.0
    %313 = vmatprep.subr.mxu0 0.0
    %314 = vmatpush1.xpose.msra.mxu0 0.0
    %315 = vmatprep.subr.mxu0 0.0
    %316 = vmatpush1.xpose.msra.mxu0 0.0
    %317 = vmatprep.subr.mxu0 0.0
    %318 = vmatpush1.xpose.msra.mxu0 0.0
    %319 = vmatprep.subr.mxu0 0.0
    %320 = vmatpush1.xpose.msra.mxu0 0.0
    %321 = vmatprep.subr.mxu0 0.0
    %322 = vmatpush1.xpose.msra.mxu0 0.0
    %323 = vmatprep.subr.mxu0 0.0
    %324 = vmatpush1.xpose.msra.mxu0 0.0
    %325 = vmatprep.subr.mxu0 0.0
    %326 = vmatpush1.xpose.msra.mxu0 0.0
    %327 = vmatprep.subr.mxu0 0.0
    %328 = vmatpush1.xpose.msra.mxu0 0.0
    %329 = vmatprep.subr.mxu0 0.0
    %330 = vmatpush1.xpose.msra.mxu0 0.0
    %331 = vmatprep.subr.mxu0 0.0
    %332 = vmatpush1.xpose.msra.mxu0 0.0
    %333 = vmatprep.subr.mxu0 0.0
    %334 = vmatpush1.xpose.msra.mxu0 0.0
    %335 = vmatprep.subr.mxu0 0.0
    %336 = vmatpush1.xpose.msra.mxu0 0.0
    %337 = vmatprep.subr.mxu0 0.0
    %338 = vmatpush1.xpose.msra.mxu0 0.0
    %339 = vmatprep.subr.mxu0 0.0
    %340 = vmatpush1.xpose.msra.mxu0 0.0
    %341 = vmatprep.subr.mxu0 0.0
    %342 = vmatpush1.xpose.msra.mxu0 0.0
    %343 = vmatprep.subr.mxu0 0.0
    %344 = vmatpush1.xpose.msra.mxu0 0.0
    %345 = vmatprep.subr.mxu0 0.0
    %346 = vmatpush1.xpose.msra.mxu0 0.0
    %347 = vmatprep.subr.mxu0 0.0
    %348 = vmatpush1.xpose.msra.mxu0 0.0
    %349 = vmatprep.subr.mxu0 0.0
    %350 = vmatpush1.xpose.msra.mxu0 0.0
    %351 = vmatprep.subr.mxu0 0.0
    %352 = vmatpush1.xpose.msra.mxu0 0.0
    %353 = vmatprep.subr.mxu0 0.0
    %354 = vmatpush1.xpose.msra.mxu0 0.0
    %355 = vmatprep.subr.mxu0 0.0
    %356 = vmatpush1.xpose.msra.mxu0 0.0
    %357 = vmatprep.subr.mxu0 0.0
    %358 = vmatpush1.xpose.msra.mxu0 0.0
    %359 = vmatprep.subr.mxu0 0.0
    %360 = vmatpush1.xpose.msra.mxu0 0.0
    %361 = vmatprep.subr.mxu0 0.0
    %362 = vmatpush1.xpose.msra.mxu0 0.0
    %363 = vmatprep.subr.mxu0 0.0
    %364 = vmatpush1.xpose.msra.mxu0 0.0
    %365 = vmatprep.subr.mxu0 0.0
    %366 = vmatpush1.xpose.msra.mxu0 0.0
    %367 = vmatprep.subr.mxu0 0.0
    %368 = vmatpush1.xpose.msra.mxu0 0.0
    %369 = vmatprep.subr.mxu0 0.0
    %370 = vmatpush1.xpose.msra.mxu0 0.0
    %371 = vmatprep.mubr.f32.mxu0 0.0
    %372 = vmatmul.mubr.f32.gmra.mrb[0].mxu0 %v303
    %v373 = vpop.f32.mrb[0].mxu0
    %v374 = vadd.f32 0.0, %v373
    %v375 = vpop.f32.mrb[0].mxu0
    %376 = vdwg.mxu0
    %v377 = vmul.f32 %v297, 0.35355338
    %v378 = vmul.f32 %v374, 0.35355338
    %v379 = vadd.f32 %v377, %v215
    %v380 = vadd.f32 %v378, %v219
    %v381 = vsel %vm225, %v379, -inf
    %382 = vmax.xlane.f32.xlu0 %v381
    %v383 = vpop.xlane.xlu0 %382
    %v384 = vsel %vm225, %v380, -inf
    %385 = vmax.xlane.f32.xlu0 %v384
    %v386 = vpop.xlane.xlu0 %385
    %v387 = vsub.f32 %v379, %v383
    %v388 = vsub.f32 %v380, %v386
    %v389 = vmul.f32 %v387, 1.442695
    %v390 = vpow.pop %v389
    %v391 = vmul.f32 %v388, 1.442695
    %v392 = vpow.pop %v391
    %v393 = vsel %vm225, %v390, 0.0
    %394 = vadd.xlane.f32.xlu0 %v393
    %v395 = vpop.xlane.xlu0 %394
    %v396 = vsel %vm225, %v392, 0.0
    %397 = vadd.xlane.f32.xlu0 %v396
    %v398 = vpop.xlane.xlu0 %397
    %v399 = vrcp.pop %v395
    %v400 = vmul.f32 %v390, %v399
    %v401 = vrcp.pop %v398
    %v402 = vmul.f32 %v392, %v401
    %403 = vrot.lane.b32.xlu0 %v200, 64
    %v404 = vpop.permute.xlu0 %403
    %v407 = vsel %vm225, %v400, 0
    %409 = vmatprep.subr.mxu0 0.0
    %410 = vmatpush1.msra.mxu0 %v404
    %411 = vmatprep.subr.mxu0 0.0
    %412 = vmatpush1.msra.mxu0 0.0
    %413 = vmatprep.subr.mxu0 0.0
    %414 = vmatpush1.msra.mxu0 0.0
    %415 = vmatprep.subr.mxu0 0.0
    %416 = vmatpush1.msra.mxu0 0.0
    %417 = vmatprep.subr.mxu0 0.0
    %418 = vmatpush1.msra.mxu0 0.0
    %419 = vmatprep.subr.mxu0 0.0
    %420 = vmatpush1.msra.mxu0 0.0
    %421 = vmatprep.subr.mxu0 0.0
    %422 = vmatpush1.msra.mxu0 0.0
    %423 = vmatprep.subr.mxu0 0.0
    %424 = vmatpush1.msra.mxu0 0.0
    %425 = vmatprep.subr.mxu0 0.0
    %426 = vmatpush1.msra.mxu0 0.0
    %427 = vmatprep.subr.mxu0 0.0
    %428 = vmatpush1.msra.mxu0 0.0
    %429 = vmatprep.subr.mxu0 0.0
    %430 = vmatpush1.msra.mxu0 0.0
    %431 = vmatprep.subr.mxu0 0.0
    %432 = vmatpush1.msra.mxu0 0.0
    %433 = vmatprep.subr.mxu0 0.0
    %434 = vmatpush1.msra.mxu0 0.0
    %435 = vmatprep.subr.mxu0 0.0
    %436 = vmatpush1.msra.mxu0 0.0
    %437 = vmatprep.subr.mxu0 0.0
    %438 = vmatpush1.msra.mxu0 0.0
    %439 = vmatprep.subr.mxu0 0.0
    %440 = vmatpush1.msra.mxu0 0.0
    %441 = vmatprep.subr.mxu0 0.0
    %442 = vmatpush1.msra.mxu0 0.0
    %443 = vmatprep.subr.mxu0 0.0
    %444 = vmatpush1.msra.mxu0 0.0
    %445 = vmatprep.subr.mxu0 0.0
    %446 = vmatpush1.msra.mxu0 0.0
    %447 = vmatprep.subr.mxu0 0.0
    %448 = vmatpush1.msra.mxu0 0.0
    %449 = vmatprep.subr.mxu0 0.0
    %450 = vmatpush1.msra.mxu0 0.0
    %451 = vmatprep.subr.mxu0 0.0
    %452 = vmatpush1.msra.mxu0 0.0
    %453 = vmatprep.subr.mxu0 0.0
    %454 = vmatpush1.msra.mxu0 0.0
    %455 = vmatprep.subr.mxu0 0.0
    %456 = vmatpush1.msra.mxu0 0.0
    %457 = vmatprep.subr.mxu0 0.0
    %458 = vmatpush1.msra.mxu0 0.0
    %459 = vmatprep.subr.mxu0 0.0
    %460 = vmatpush1.msra.mxu0 0.0
    %461 = vmatprep.subr.mxu0 0.0
    %462 = vmatpush1.msra.mxu0 0.0
    %463 = vmatprep.subr.mxu0 0.0
    %464 = vmatpush1.msra.mxu0 0.0
    %465 = vmatprep.subr.mxu0 0.0
    %466 = vmatpush1.msra.mxu0 0.0
    %467 = vmatprep.subr.mxu0 0.0
    %468 = vmatpush1.msra.mxu0 0.0
    %469 = vmatprep.subr.mxu0 0.0
    %470 = vmatpush1.msra.mxu0 0.0
    %471 = vmatprep.subr.mxu0 0.0
    %472 = vmatpush1.msra.mxu0 0.0
    %473 = vmatprep.mubr.f32.mxu0 0.0
    %474 = vmatmul.mubr.f32.gmra.mrb[0].mxu0 %v407
    %v475 = vpop.f32.mrb[0].mxu0
    %v476 = vadd.f32 0.0, %v475
    %v477 = vpop.f32.mrb[0].mxu0
    %478 = vdwg.mxu0
    %479 = vrot.lane.b32.xlu0 %v205, 64
    %v480 = vpop.permute.xlu0 %479
    %v483 = vsel %vm225, %v402, 0
    %485 = vmatprep.subr.mxu0 0.0
    %486 = vmatpush1.msra.mxu0 %v480
    %487 = vmatprep.subr.mxu0 0.0
    %488 = vmatpush1.msra.mxu0 0.0
    %489 = vmatprep.subr.mxu0 0.0
    %490 = vmatpush1.msra.mxu0 0.0
    %491 = vmatprep.subr.mxu0 0.0
    %492 = vmatpush1.msra.mxu0 0.0
    %493 = vmatprep.subr.mxu0 0.0
    %494 = vmatpush1.msra.mxu0 0.0
    %495 = vmatprep.subr.mxu0 0.0
    %496 = vmatpush1.msra.mxu0 0.0
    %497 = vmatprep.subr.mxu0 0.0
    %498 = vmatpush1.msra.mxu0 0.0
    %499 = vmatprep.subr.mxu0 0.0
    %500 = vmatpush1.msra.mxu0 0.0
    %501 = vmatprep.subr.mxu0 0.0
    %502 = vmatpush1.msra.mxu0 0.0
    %503 = vmatprep.subr.mxu0 0.0
    %504 = vmatpush1.msra.mxu0 0.0
    %505 = vmatprep.subr.mxu0 0.0
    %506 = vmatpush1.msra.mxu0 0.0
    %507 = vmatprep.subr.mxu0 0.0
    %508 = vmatpush1.msra.mxu0 0.0
    %509 = vmatprep.subr.mxu0 0.0
    %510 = vmatpush1.msra.mxu0 0.0
    %511 = vmatprep.subr.mxu0 0.0
    %512 = vmatpush1.msra.mxu0 0.0
    %513 = vmatprep.subr.mxu0 0.0
    %514 = vmatpush1.msra.mxu0 0.0
    %515 = vmatprep.subr.mxu0 0.0
    %516 = vmatpush1.msra.mxu0 0.0
    %517 = vmatprep.subr.mxu0 0.0
    %518 = vmatpush1.msra.mxu0 0.0
    %519 = vmatprep.subr.mxu0 0.0
    %520 = vmatpush1.msra.mxu0 0.0
    %521 = vmatprep.subr.mxu0 0.0
    %522 = vmatpush1.msra.mxu0 0.0
    %523 = vmatprep.subr.mxu0 0.0
    %524 = vmatpush1.msra.mxu0 0.0
    %525 = vmatprep.subr.mxu0 0.0
    %526 = vmatpush1.msra.mxu0 0.0
    %527 = vmatprep.subr.mxu0 0.0
    %528 = vmatpush1.msra.mxu0 0.0
    %529 = vmatprep.subr.mxu0 0.0
    %530 = vmatpush1.msra.mxu0 0.0
    %531 = vmatprep.subr.mxu0 0.0
    %532 = vmatpush1.msra.mxu0 0.0
    %533 = vmatprep.subr.mxu0 0.0
    %534 = vmatpush1.msra.mxu0 0.0
    %535 = vmatprep.subr.mxu0 0.0
    %536 = vmatpush1.msra.mxu0 0.0
    %537 = vmatprep.subr.mxu0 0.0
    %538 = vmatpush1.msra.mxu0 0.0
    %539 = vmatprep.subr.mxu0 0.0
    %540 = vmatpush1.msra.mxu0 0.0
    %541 = vmatprep.subr.mxu0 0.0
    %542 = vmatpush1.msra.mxu0 0.0
    %543 = vmatprep.subr.mxu0 0.0
    %544 = vmatpush1.msra.mxu0 0.0
    %545 = vmatprep.subr.mxu0 0.0
    %546 = vmatpush1.msra.mxu0 0.0
    %547 = vmatprep.subr.mxu0 0.0
    %548 = vmatpush1.msra.mxu0 0.0
    %549 = vmatprep.mubr.f32.mxu0 0.0
    %550 = vmatmul.mubr.f32.gmra.mrb[0].mxu0 %v483
    %v551 = vpop.f32.mrb[0].mxu0
    %v552 = vadd.f32 0.0, %v551
    %v553 = vpop.f32.mrb[0].mxu0
    %554 = vdwg.mxu0
    %555 = vrot.lane.b32.xlu0 %v200, 120
    %v556 = vpop.permute.xlu0 %555
    %557 = vrot.lane.b32.xlu0 %v200, 88
    %v558 = vpop.permute.xlu0 %557
    %v559 = vsel %vm225, %v556, 0
    %v561 = vsel %vm225, %v558, 0
    %563 = vmatprep.subr.mxu0 0.0
    %564 = vmatpush1.xpose.msra.mxu0 %v561
    %565 = vmatprep.subr.mxu0 0.0
    %566 = vmatpush1.xpose.msra.mxu0 0.0
    %567 = vmatprep.subr.mxu0 0.0
    %568 = vmatpush1.xpose.msra.mxu0 0.0
    %569 = vmatprep.subr.mxu0 0.0
    %570 = vmatpush1.xpose.msra.mxu0 0.0
    %571 = vmatprep.subr.mxu0 0.0
    %572 = vmatpush1.xpose.msra.mxu0 0.0
    %573 = vmatprep.subr.mxu0 0.0
    %574 = vmatpush1.xpose.msra.mxu0 0.0
    %575 = vmatprep.subr.mxu0 0.0
    %576 = vmatpush1.xpose.msra.mxu0 0.0
    %577 = vmatprep.subr.mxu0 0.0
    %578 = vmatpush1.xpose.msra.mxu0 0.0
    %579 = vmatprep.subr.mxu0 0.0
    %580 = vmatpush1.xpose.msra.mxu0 0.0
    %581 = vmatprep.subr.mxu0 0.0
    %582 = vmatpush1.xpose.msra.mxu0 0.0
    %583 = vmatprep.subr.mxu0 0.0
    %584 = vmatpush1.xpose.msra.mxu0 0.0
    %585 = vmatprep.subr.mxu0 0.0
    %586 = vmatpush1.xpose.msra.mxu0 0.0
    %587 = vmatprep.subr.mxu0 0.0
    %588 = vmatpush1.xpose.msra.mxu0 0.0
    %589 = vmatprep.subr.mxu0 0.0
    %590 = vmatpush1.xpose.msra.mxu0 0.0
    %591 = vmatprep.subr.mxu0 0.0
    %592 = vmatpush1.xpose.msra.mxu0 0.0
    %593 = vmatprep.subr.mxu0 0.0
    %594 = vmatpush1.xpose.msra.mxu0 0.0
    %595 = vmatprep.subr.mxu0 0.0
    %596 = vmatpush1.xpose.msra.mxu0 0.0
    %597 = vmatprep.subr.mxu0 0.0
    %598 = vmatpush1.xpose.msra.mxu0 0.0
    %599 = vmatprep.subr.mxu0 0.0
    %600 = vmatpush1.xpose.msra.mxu0 0.0
    %601 = vmatprep.subr.mxu0 0.0
    %602 = vmatpush1.xpose.msra.mxu0 0.0
    %603 = vmatprep.subr.mxu0 0.0
    %604 = vmatpush1.xpose.msra.mxu0 0.0
    %605 = vmatprep.subr.mxu0 0.0
    %606 = vmatpush1.xpose.msra.mxu0 0.0
    %607 = vmatprep.subr.mxu0 0.0
    %608 = vmatpush1.xpose.msra.mxu0 0.0
    %609 = vmatprep.subr.mxu0 0.0
    %610 = vmatpush1.xpose.msra.mxu0 0.0
    %611 = vmatprep.subr.mxu0 0.0
    %612 = vmatpush1.xpose.msra.mxu0 0.0
    %613 = vmatprep.subr.mxu0 0.0
    %614 = vmatpush1.xpose.msra.mxu0 0.0
    %615 = vmatprep.subr.mxu0 0.0
    %616 = vmatpush1.xpose.msra.mxu0 0.0
    %617 = vmatprep.subr.mxu0 0.0
    %618 = vmatpush1.xpose.msra.mxu0 0.0
    %619 = vmatprep.subr.mxu0 0.0
    %620 = vmatpush1.xpose.msra.mxu0 0.0
    %621 = vmatprep.subr.mxu0 0.0
    %622 = vmatpush1.xpose.msra.mxu0 0.0
    %623 = vmatprep.subr.mxu0 0.0
    %624 = vmatpush1.xpose.msra.mxu0 0.0
    %625 = vmatprep.subr.mxu0 0.0
    %626 = vmatpush1.xpose.msra.mxu0 0.0
    %627 = vmatprep.mubr.f32.mxu0 0.0
    %628 = vmatmul.mubr.f32.gmra.mrb[0].mxu0 %v559
    %v629 = vpop.f32.mrb[0].mxu0
    %v630 = vadd.f32 0.0, %v629
    %v631 = vpop.f32.mrb[0].mxu0
    %632 = vdwg.mxu0
    %633 = vrot.lane.b32.xlu0 %v205, 120
    %v634 = vpop.permute.xlu0 %633
    %635 = vrot.lane.b32.xlu0 %v205, 88
    %v636 = vpop.permute.xlu0 %635
    %v637 = vsel %vm225, %v634, 0
    %v639 = vsel %vm225, %v636, 0
    %641 = vmatprep.subr.mxu0 0.0
    %642 = vmatpush1.xpose.msra.mxu0 %v639
    %643 = vmatprep.subr.mxu0 0.0
    %644 = vmatpush1.xpose.msra.mxu0 0.0
    %645 = vmatprep.subr.mxu0 0.0
    %646 = vmatpush1.xpose.msra.mxu0 0.0
    %647 = vmatprep.subr.mxu0 0.0
    %648 = vmatpush1.xpose.msra.mxu0 0.0
    %649 = vmatprep.subr.mxu0 0.0
    %650 = vmatpush1.xpose.msra.mxu0 0.0
    %651 = vmatprep.subr.mxu0 0.0
    %652 = vmatpush1.xpose.msra.mxu0 0.0
    %653 = vmatprep.subr.mxu0 0.0
    %654 = vmatpush1.xpose.msra.mxu0 0.0
    %655 = vmatprep.subr.mxu0 0.0
    %656 = vmatpush1.xpose.msra.mxu0 0.0
    %657 = vmatprep.subr.mxu0 0.0
    %658 = vmatpush1.xpose.msra.mxu0 0.0
    %659 = vmatprep.subr.mxu0 0.0
    %660 = vmatpush1.xpose.msra.mxu0 0.0
    %661 = vmatprep.subr.mxu0 0.0
    %662 = vmatpush1.xpose.msra.mxu0 0.0
    %663 = vmatprep.subr.mxu0 0.0
    %664 = vmatpush1.xpose.msra.mxu0 0.0
    %665 = vmatprep.subr.mxu0 0.0
    %666 = vmatpush1.xpose.msra.mxu0 0.0
    %667 = vmatprep.subr.mxu0 0.0
    %668 = vmatpush1.xpose.msra.mxu0 0.0
    %669 = vmatprep.subr.mxu0 0.0
    %670 = vmatpush1.xpose.msra.mxu0 0.0
    %671 = vmatprep.subr.mxu0 0.0
    %672 = vmatpush1.xpose.msra.mxu0 0.0
    %673 = vmatprep.subr.mxu0 0.0
    %674 = vmatpush1.xpose.msra.mxu0 0.0
    %675 = vmatprep.subr.mxu0 0.0
    %676 = vmatpush1.xpose.msra.mxu0 0.0
    %677 = vmatprep.subr.mxu0 0.0
    %678 = vmatpush1.xpose.msra.mxu0 0.0
    %679 = vmatprep.subr.mxu0 0.0
    %680 = vmatpush1.xpose.msra.mxu0 0.0
    %681 = vmatprep.subr.mxu0 0.0
    %682 = vmatpush1.xpose.msra.mxu0 0.0
    %683 = vmatprep.subr.mxu0 0.0
    %684 = vmatpush1.xpose.msra.mxu0 0.0
    %685 = vmatprep.subr.mxu0 0.0
    %686 = vmatpush1.xpose.msra.mxu0 0.0
    %687 = vmatprep.subr.mxu0 0.0
    %688 = vmatpush1.xpose.msra.mxu0 0.0
    %689 = vmatprep.subr.mxu0 0.0
    %690 = vmatpush1.xpose.msra.mxu0 0.0
    %691 = vmatprep.subr.mxu0 0.0
    %692 = vmatpush1.xpose.msra.mxu0 0.0
    %693 = vmatprep.subr.mxu0 0.0
    %694 = vmatpush1.xpose.msra.mxu0 0.0
    %695 = vmatprep.subr.mxu0 0.0
    %696 = vmatpush1.xpose.msra.mxu0 0.0
    %697 = vmatprep.subr.mxu0 0.0
    %698 = vmatpush1.xpose.msra.mxu0 0.0
    %699 = vmatprep.subr.mxu0 0.0
    %700 = vmatpush1.xpose.msra.mxu0 0.0
    %701 = vmatprep.subr.mxu0 0.0
    %702 = vmatpush1.xpose.msra.mxu0 0.0
    %703 = vmatprep.subr.mxu0 0.0
    %704 = vmatpush1.xpose.msra.mxu0 0.0
    %705 = vmatprep.mubr.f32.mxu0 0.0
    %706 = vmatmul.mubr.f32.gmra.mrb[0].mxu0 %v637
    %v707 = vpop.f32.mrb[0].mxu0
    %v708 = vadd.f32 0.0, %v707
    %v709 = vpop.f32.mrb[0].mxu0
    %710 = vdwg.mxu0
    %v711 = vmul.f32 %v630, 0.35355338
    %v712 = vmul.f32 %v708, 0.35355338
    %v713 = vadd.f32 %v711, %v215
    %v714 = vadd.f32 %v712, %v219
    %v715 = vsel %vm225, %v713, -inf
    %716 = vmax.xlane.f32.xlu0 %v715
    %v717 = vpop.xlane.xlu0 %716
    %v718 = vsel %vm225, %v714, -inf
    %719 = vmax.xlane.f32.xlu0 %v718
    %v720 = vpop.xlane.xlu0 %719
    %v721 = vsub.f32 %v713, %v717
    %v722 = vsub.f32 %v714, %v720
    %v723 = vmul.f32 %v721, 1.442695
    %v724 = vpow.pop %v723
    %v725 = vmul.f32 %v722, 1.442695
    %v726 = vpow.pop %v725
    %v727 = vsel %vm225, %v724, 0.0
    %728 = vadd.xlane.f32.xlu0 %v727
    %v729 = vpop.xlane.xlu0 %728
    %v730 = vsel %vm225, %v726, 0.0
    %731 = vadd.xlane.f32.xlu0 %v730
    %v732 = vpop.xlane.xlu0 %731
    %v733 = vrcp.pop %v729
    %v734 = vmul.f32 %v724, %v733
    %v735 = vrcp.pop %v732
    %v736 = vmul.f32 %v726, %v735
    %737 = vrot.lane.b32.xlu0 %v200, 56
    %v738 = vpop.permute.xlu0 %737
    %v741 = vsel %vm225, %v734, 0
    %743 = vmatprep.subr.mxu0 0.0
    %744 = vmatpush1.msra.mxu0 %v738
    %745 = vmatprep.subr.mxu0 0.0
    %746 = vmatpush1.msra.mxu0 0.0
    %747 = vmatprep.subr.mxu0 0.0
    %748 = vmatpush1.msra.mxu0 0.0
    %749 = vmatprep.subr.mxu0 0.0
    %750 = vmatpush1.msra.mxu0 0.0
    %751 = vmatprep.subr.mxu0 0.0
    %752 = vmatpush1.msra.mxu0 0.0
    %753 = vmatprep.subr.mxu0 0.0
    %754 = vmatpush1.msra.mxu0 0.0
    %755 = vmatprep.subr.mxu0 0.0
    %756 = vmatpush1.msra.mxu0 0.0
    %757 = vmatprep.subr.mxu0 0.0
    %758 = vmatpush1.msra.mxu0 0.0
    %759 = vmatprep.subr.mxu0 0.0
    %760 = vmatpush1.msra.mxu0 0.0
    %761 = vmatprep.subr.mxu0 0.0
    %762 = vmatpush1.msra.mxu0 0.0
    %763 = vmatprep.subr.mxu0 0.0
    %764 = vmatpush1.msra.mxu0 0.0
    %765 = vmatprep.subr.mxu0 0.0
    %766 = vmatpush1.msra.mxu0 0.0
    %767 = vmatprep.subr.mxu0 0.0
    %768 = vmatpush1.msra.mxu0 0.0
    %769 = vmatprep.subr.mxu0 0.0
    %770 = vmatpush1.msra.mxu0 0.0
    %771 = vmatprep.subr.mxu0 0.0
    %772 = vmatpush1.msra.mxu0 0.0
    %773 = vmatprep.subr.mxu0 0.0
    %774 = vmatpush1.msra.mxu0 0.0
    %775 = vmatprep.subr.mxu0 0.0
    %776 = vmatpush1.msra.mxu0 0.0
    %777 = vmatprep.subr.mxu0 0.0
    %778 = vmatpush1.msra.mxu0 0.0
    %779 = vmatprep.subr.mxu0 0.0
    %780 = vmatpush1.msra.mxu0 0.0
    %781 = vmatprep.subr.mxu0 0.0
    %782 = vmatpush1.msra.mxu0 0.0
    %783 = vmatprep.subr.mxu0 0.0
    %784 = vmatpush1.msra.mxu0 0.0
    %785 = vmatprep.subr.mxu0 0.0
    %786 = vmatpush1.msra.mxu0 0.0
    %787 = vmatprep.subr.mxu0 0.0
    %788 = vmatpush1.msra.mxu0 0.0
    %789 = vmatprep.subr.mxu0 0.0
    %790 = vmatpush1.msra.mxu0 0.0
    %791 = vmatprep.subr.mxu0 0.0
    %792 = vmatpush1.msra.mxu0 0.0
    %793 = vmatprep.subr.mxu0 0.0
    %794 = vmatpush1.msra.mxu0 0.0
    %795 = vmatprep.subr.mxu0 0.0
    %796 = vmatpush1.msra.mxu0 0.0
    %797 = vmatprep.subr.mxu0 0.0
    %798 = vmatpush1.msra.mxu0 0.0
    %799 = vmatprep.subr.mxu0 0.0
    %800 = vmatpush1.msra.mxu0 0.0
    %801 = vmatprep.subr.mxu0 0.0
    %802 = vmatpush1.msra.mxu0 0.0
    %803 = vmatprep.subr.mxu0 0.0
    %804 = vmatpush1.msra.mxu0 0.0
    %805 = vmatprep.subr.mxu0 0.0
    %806 = vmatpush1.msra.mxu0 0.0
    %807 = vmatprep.mubr.f32.mxu0 0.0
    %808 = vmatmul.mubr.f32.gmra.mrb[0].mxu0 %v741
    %v809 = vpop.f32.mrb[0].mxu0
    %v810 = vadd.f32 0.0, %v809
    %v811 = vpop.f32.mrb[0].mxu0
    %812 = vdwg.mxu0
    %813 = vrot.lane.b32.xlu0 %v205, 56
    %v814 = vpop.permute.xlu0 %813
    %v817 = vsel %vm225, %v736, 0
    %819 = vmatprep.subr.mxu0 0.0
    %820 = vmatpush1.msra.mxu0 %v814
    %821 = vmatprep.subr.mxu0 0.0
    %822 = vmatpush1.msra.mxu0 0.0
    %823 = vmatprep.subr.mxu0 0.0
    %824 = vmatpush1.msra.mxu0 0.0
    %825 = vmatprep.subr.mxu0 0.0
    %826 = vmatpush1.msra.mxu0 0.0
    %827 = vmatprep.subr.mxu0 0.0
    %828 = vmatpush1.msra.mxu0 0.0
    %829 = vmatprep.subr.mxu0 0.0
    %830 = vmatpush1.msra.mxu0 0.0
    %831 = vmatprep.subr.mxu0 0.0
    %832 = vmatpush1.msra.mxu0 0.0
    %833 = vmatprep.subr.mxu0 0.0
    %834 = vmatpush1.msra.mxu0 0.0
    %835 = vmatprep.subr.mxu0 0.0
    %836 = vmatpush1.msra.mxu0 0.0
    %837 = vmatprep.subr.mxu0 0.0
    %838 = vmatpush1.msra.mxu0 0.0
    %839 = vmatprep.subr.mxu0 0.0
    %840 = vmatpush1.msra.mxu0 0.0
    %841 = vmatprep.subr.mxu0 0.0
    %842 = vmatpush1.msra.mxu0 0.0
    %843 = vmatprep.subr.mxu0 0.0
    %844 = vmatpush1.msra.mxu0 0.0
    %845 = vmatprep.subr.mxu0 0.0
    %846 = vmatpush1.msra.mxu0 0.0
    %847 = vmatprep.subr.mxu0 0.0
    %848 = vmatpush1.msra.mxu0 0.0
    %849 = vmatprep.subr.mxu0 0.0
    %850 = vmatpush1.msra.mxu0 0.0
    %851 = vmatprep.subr.mxu0 0.0
    %852 = vmatpush1.msra.mxu0 0.0
    %853 = vmatprep.subr.mxu0 0.0
    %854 = vmatpush1.msra.mxu0 0.0
    %855 = vmatprep.subr.mxu0 0.0
    %856 = vmatpush1.msra.mxu0 0.0
    %857 = vmatprep.subr.mxu0 0.0
    %858 = vmatpush1.msra.mxu0 0.0
    %859 = vmatprep.subr.mxu0 0.0
    %860 = vmatpush1.msra.mxu0 0.0
    %861 = vmatprep.subr.mxu0 0.0
    %862 = vmatpush1.msra.mxu0 0.0
    %863 = vmatprep.subr.mxu0 0.0
    %864 = vmatpush1.msra.mxu0 0.0
    %865 = vmatprep.subr.mxu0 0.0
    %866 = vmatpush1.msra.mxu0 0.0
    %867 = vmatprep.subr.mxu0 0.0
    %868 = vmatpush1.msra.mxu0 0.0
    %869 = vmatprep.subr.mxu0 0.0
    %870 = vmatpush1.msra.mxu0 0.0
    %871 = vmatprep.subr.mxu0 0.0
    %872 = vmatpush1.msra.mxu0 0.0
    %873 = vmatprep.subr.mxu0 0.0
    %874 = vmatpush1.msra.mxu0 0.0
    %875 = vmatprep.subr.mxu0 0.0
    %876 = vmatpush1.msra.mxu0 0.0
    %877 = vmatprep.subr.mxu0 0.0
    %878 = vmatpush1.msra.mxu0 0.0
    %879 = vmatprep.subr.mxu0 0.0
    %880 = vmatpush1.msra.mxu0 0.0
    %881 = vmatprep.subr.mxu0 0.0
    %882 = vmatpush1.msra.mxu0 0.0
    %883 = vmatprep.mubr.f32.mxu0 0.0
    %884 = vmatmul.mubr.f32.gmra.mrb[0].mxu0 %v817
    %v885 = vpop.f32.mrb[0].mxu0
    %v886 = vadd.f32 0.0, %v885
    %v887 = vpop.f32.mrb[0].mxu0
    %888 = vdwg.mxu0
    %889 = vrot.lane.b32.xlu0 %v200, 112
    %v890 = vpop.permute.xlu0 %889
    %891 = vrot.lane.b32.xlu0 %v200, 80
    %v892 = vpop.permute.xlu0 %891
    %v893 = vsel %vm225, %v890, 0
    %v895 = vsel %vm225, %v892, 0
    %897 = vmatprep.subr.mxu0 0.0
    %898 = vmatpush1.xpose.msra.mxu0 %v895
    %899 = vmatprep.subr.mxu0 0.0
    %900 = vmatpush1.xpose.msra.mxu0 0.0
    %901 = vmatprep.subr.mxu0 0.0
    %902 = vmatpush1.xpose.msra.mxu0 0.0
    %903 = vmatprep.subr.mxu0 0.0
    %904 = vmatpush1.xpose.msra.mxu0 0.0
    %905 = vmatprep.subr.mxu0 0.0
    %906 = vmatpush1.xpose.msra.mxu0 0.0
    %907 = vmatprep.subr.mxu0 0.0
    %908 = vmatpush1.xpose.msra.mxu0 0.0
    %909 = vmatprep.subr.mxu0 0.0
    %910 = vmatpush1.xpose.msra.mxu0 0.0
    %911 = vmatprep.subr.mxu0 0.0
    %912 = vmatpush1.xpose.msra.mxu0 0.0
    %913 = vmatprep.subr.mxu0 0.0
    %914 = vmatpush1.xpose.msra.mxu0 0.0
    %915 = vmatprep.subr.mxu0 0.0
    %916 = vmatpush1.xpose.msra.mxu0 0.0
    %917 = vmatprep.subr.mxu0 0.0
    %918 = vmatpush1.xpose.msra.mxu0 0.0
    %919 = vmatprep.subr.mxu0 0.0
    %920 = vmatpush1.xpose.msra.mxu0 0.0
    %921 = vmatprep.subr.mxu0 0.0
    %922 = vmatpush1.xpose.msra.mxu0 0.0
    %923 = vmatprep.subr.mxu0 0.0
    %924 = vmatpush1.xpose.msra.mxu0 0.0
    %925 = vmatprep.subr.mxu0 0.0
    %926 = vmatpush1.xpose.msra.mxu0 0.0
    %927 = vmatprep.subr.mxu0 0.0
    %928 = vmatpush1.xpose.msra.mxu0 0.0
    %929 = vmatprep.subr.mxu0 0.0
    %930 = vmatpush1.xpose.msra.mxu0 0.0
    %931 = vmatprep.subr.mxu0 0.0
    %932 = vmatpush1.xpose.msra.mxu0 0.0
    %933 = vmatprep.subr.mxu0 0.0
    %934 = vmatpush1.xpose.msra.mxu0 0.0
    %935 = vmatprep.subr.mxu0 0.0
    %936 = vmatpush1.xpose.msra.mxu0 0.0
    %937 = vmatprep.subr.mxu0 0.0
    %938 = vmatpush1.xpose.msra.mxu0 0.0
    %939 = vmatprep.subr.mxu0 0.0
    %940 = vmatpush1.xpose.msra.mxu0 0.0
    %941 = vmatprep.subr.mxu0 0.0
    %942 = vmatpush1.xpose.msra.mxu0 0.0
    %943 = vmatprep.subr.mxu0 0.0
    %944 = vmatpush1.xpose.msra.mxu0 0.0
    %945 = vmatprep.subr.mxu0 0.0
    %946 = vmatpush1.xpose.msra.mxu0 0.0
    %947 = vmatprep.subr.mxu0 0.0
    %948 = vmatpush1.xpose.msra.mxu0 0.0
    %949 = vmatprep.subr.mxu0 0.0
    %950 = vmatpush1.xpose.msra.mxu0 0.0
    %951 = vmatprep.subr.mxu0 0.0
    %952 = vmatpush1.xpose.msra.mxu0 0.0
    %953 = vmatprep.subr.mxu0 0.0
    %954 = vmatpush1.xpose.msra.mxu0 0.0
    %955 = vmatprep.subr.mxu0 0.0
    %956 = vmatpush1.xpose.msra.mxu0 0.0
    %957 = vmatprep.subr.mxu0 0.0
    %958 = vmatpush1.xpose.msra.mxu0 0.0
    %959 = vmatprep.subr.mxu0 0.0
    %960 = vmatpush1.xpose.msra.mxu0 0.0
    %961 = vmatprep.mubr.f32.mxu0 0.0
    %962 = vmatmul.mubr.f32.gmra.mrb[0].mxu0 %v893
    %v963 = vpop.f32.mrb[0].mxu0
    %v964 = vadd.f32 0.0, %v963
    %v965 = vpop.f32.mrb[0].mxu0
    %966 = vdwg.mxu0
    %967 = vrot.lane.b32.xlu0 %v205, 112
    %v968 = vpop.permute.xlu0 %967
    %969 = vrot.lane.b32.xlu0 %v205, 80
    %v970 = vpop.permute.xlu0 %969
    %v971 = vsel %vm225, %v968, 0
    %v973 = vsel %vm225, %v970, 0
    %975 = vmatprep.subr.mxu0 0.0
    %976 = vmatpush1.xpose.msra.mxu0 %v973
    %977 = vmatprep.subr.mxu0 0.0
    %978 = vmatpush1.xpose.msra.mxu0 0.0
    %979 = vmatprep.subr.mxu0 0.0
    %980 = vmatpush1.xpose.msra.mxu0 0.0
    %981 = vmatprep.subr.mxu0 0.0
    %982 = vmatpush1.xpose.msra.mxu0 0.0
    %983 = vmatprep.subr.mxu0 0.0
    %984 = vmatpush1.xpose.msra.mxu0 0.0
    %985 = vmatprep.subr.mxu0 0.0
    %986 = vmatpush1.xpose.msra.mxu0 0.0
    %987 = vmatprep.subr.mxu0 0.0
    %988 = vmatpush1.xpose.msra.mxu0 0.0
    %989 = vmatprep.subr.mxu0 0.0
    %990 = vmatpush1.xpose.msra.mxu0 0.0
    %991 = vmatprep.subr.mxu0 0.0
    %992 = vmatpush1.xpose.msra.mxu0 0.0
    %993 = vmatprep.subr.mxu0 0.0
    %994 = vmatpush1.xpose.msra.mxu0 0.0
    %995 = vmatprep.subr.mxu0 0.0
    %996 = vmatpush1.xpose.msra.mxu0 0.0
    %997 = vmatprep.subr.mxu0 0.0
    %998 = vmatpush1.xpose.msra.mxu0 0.0
    %999 = vmatprep.subr.mxu0 0.0
    %1000 = vmatpush1.xpose.msra.mxu0 0.0
    %1001 = vmatprep.subr.mxu0 0.0
    %1002 = vmatpush1.xpose.msra.mxu0 0.0
    %1003 = vmatprep.subr.mxu0 0.0
    %1004 = vmatpush1.xpose.msra.mxu0 0.0
    %1005 = vmatprep.subr.mxu0 0.0
    %1006 = vmatpush1.xpose.msra.mxu0 0.0
    %1007 = vmatprep.subr.mxu0 0.0
    %1008 = vmatpush1.xpose.msra.mxu0 0.0
    %1009 = vmatprep.subr.mxu0 0.0
    %1010 = vmatpush1.xpose.msra.mxu0 0.0
    %1011 = vmatprep.subr.mxu0 0.0
    %1012 = vmatpush1.xpose.msra.mxu0 0.0
    %1013 = vmatprep.subr.mxu0 0.0
    %1014 = vmatpush1.xpose.msra.mxu0 0.0
    %1015 = vmatprep.subr.mxu0 0.0
    %1016 = vmatpush1.xpose.msra.mxu0 0.0
    %1017 = vmatprep.subr.mxu0 0.0
    %1018 = vmatpush1.xpose.msra.mxu0 0.0
    %1019 = vmatprep.subr.mxu0 0.0
    %1020 = vmatpush1.xpose.msra.mxu0 0.0
    %1021 = vmatprep.subr.mxu0 0.0
    %1022 = vmatpush1.xpose.msra.mxu0 0.0
    %1023 = vmatprep.subr.mxu0 0.0
    %1024 = vmatpush1.xpose.msra.mxu0 0.0
    %1025 = vmatprep.subr.mxu0 0.0
    %1026 = vmatpush1.xpose.msra.mxu0 0.0
    %1027 = vmatprep.subr.mxu0 0.0
    %1028 = vmatpush1.xpose.msra.mxu0 0.0
    %1029 = vmatprep.subr.mxu0 0.0
    %1030 = vmatpush1.xpose.msra.mxu0 0.0
    %1031 = vmatprep.subr.mxu0 0.0
    %1032 = vmatpush1.xpose.msra.mxu0 0.0
    %1033 = vmatprep.subr.mxu0 0.0
    %1034 = vmatpush1.xpose.msra.mxu0 0.0
    %1035 = vmatprep.subr.mxu0 0.0
    %1036 = vmatpush1.xpose.msra.mxu0 0.0
    %1037 = vmatprep.subr.mxu0 0.0
    %1038 = vmatpush1.xpose.msra.mxu0 0.0
    %1039 = vmatprep.mubr.f32.mxu0 0.0
    %1040 = vmatmul.mubr.f32.gmra.mrb[0].mxu0 %v971
    %v1041 = vpop.f32.mrb[0].mxu0
    %v1042 = vadd.f32 0.0, %v1041
    %v1043 = vpop.f32.mrb[0].mxu0
    %1044 = vdwg.mxu0
    %v1045 = vmul.f32 %v964, 0.35355338
    %v1046 = vmul.f32 %v1042, 0.35355338
    %v1047 = vadd.f32 %v1045, %v215
    %v1048 = vadd.f32 %v1046, %v219
    %v1049 = vsel %vm225, %v1047, -inf
    %1050 = vmax.xlane.f32.xlu0 %v1049
    %v1051 = vpop.xlane.xlu0 %1050
    %v1052 = vsel %vm225, %v1048, -inf
    %1053 = vmax.xlane.f32.xlu0 %v1052
    %v1054 = vpop.xlane.xlu0 %1053
    %v1055 = vsub.f32 %v1047, %v1051
    %v1056 = vsub.f32 %v1048, %v1054
    %v1057 = vmul.f32 %v1055, 1.442695
    %v1058 = vpow.pop %v1057
    %v1059 = vmul.f32 %v1056, 1.442695
    %v1060 = vpow.pop %v1059
    %v1061 = vsel %vm225, %v1058, 0.0
    %1062 = vadd.xlane.f32.xlu0 %v1061
    %v1063 = vpop.xlane.xlu0 %1062
    %v1064 = vsel %vm225, %v1060, 0.0
    %1065 = vadd.xlane.f32.xlu0 %v1064
    %v1066 = vpop.xlane.xlu0 %1065
    %v1067 = vrcp.pop %v1063
    %v1068 = vmul.f32 %v1058, %v1067
    %v1069 = vrcp.pop %v1066
    %v1070 = vmul.f32 %v1060, %v1069
    %1071 = vrot.lane.b32.xlu0 %v200, 48
    %v1072 = vpop.permute.xlu0 %1071
    %v1075 = vsel %vm225, %v1068, 0
    %1077 = vmatprep.subr.mxu0 0.0
    %1078 = vmatpush1.msra.mxu0 %v1072
    %1079 = vmatprep.subr.mxu0 0.0
    %1080 = vmatpush1.msra.mxu0 0.0
    %1081 = vmatprep.subr.mxu0 0.0
    %1082 = vmatpush1.msra.mxu0 0.0
    %1083 = vmatprep.subr.mxu0 0.0
    %1084 = vmatpush1.msra.mxu0 0.0
    %1085 = vmatprep.subr.mxu0 0.0
    %1086 = vmatpush1.msra.mxu0 0.0
    %1087 = vmatprep.subr.mxu0 0.0
    %1088 = vmatpush1.msra.mxu0 0.0
    %1089 = vmatprep.subr.mxu0 0.0
    %1090 = vmatpush1.msra.mxu0 0.0
    %1091 = vmatprep.subr.mxu0 0.0
    %1092 = vmatpush1.msra.mxu0 0.0
    %1093 = vmatprep.subr.mxu0 0.0
    %1094 = vmatpush1.msra.mxu0 0.0
    %1095 = vmatprep.subr.mxu0 0.0
    %1096 = vmatpush1.msra.mxu0 0.0
    %1097 = vmatprep.subr.mxu0 0.0
    %1098 = vmatpush1.msra.mxu0 0.0
    %1099 = vmatprep.subr.mxu0 0.0
    %1100 = vmatpush1.msra.mxu0 0.0
    %1101 = vmatprep.subr.mxu0 0.0
    %1102 = vmatpush1.msra.mxu0 0.0
    %1103 = vmatprep.subr.mxu0 0.0
    %1104 = vmatpush1.msra.mxu0 0.0
    %1105 = vmatprep.subr.mxu0 0.0
    %1106 = vmatpush1.msra.mxu0 0.0
    %1107 = vmatprep.subr.mxu0 0.0
    %1108 = vmatpush1.msra.mxu0 0.0
    %1109 = vmatprep.subr.mxu0 0.0
    %1110 = vmatpush1.msra.mxu0 0.0
    %1111 = vmatprep.subr.mxu0 0.0
    %1112 = vmatpush1.msra.mxu0 0.0
    %1113 = vmatprep.subr.mxu0 0.0
    %1114 = vmatpush1.msra.mxu0 0.0
    %1115 = vmatprep.subr.mxu0 0.0
    %1116 = vmatpush1.msra.mxu0 0.0
    %1117 = vmatprep.subr.mxu0 0.0
    %1118 = vmatpush1.msra.mxu0 0.0
    %1119 = vmatprep.subr.mxu0 0.0
    %1120 = vmatpush1.msra.mxu0 0.0
    %1121 = vmatprep.subr.mxu0 0.0
    %1122 = vmatpush1.msra.mxu0 0.0
    %1123 = vmatprep.subr.mxu0 0.0
    %1124 = vmatpush1.msra.mxu0 0.0
    %1125 = vmatprep.subr.mxu0 0.0
    %1126 = vmatpush1.msra.mxu0 0.0
    %1127 = vmatprep.subr.mxu0 0.0
    %1128 = vmatpush1.msra.mxu0 0.0
    %1129 = vmatprep.subr.mxu0 0.0
    %1130 = vmatpush1.msra.mxu0 0.0
    %1131 = vmatprep.subr.mxu0 0.0
    %1132 = vmatpush1.msra.mxu0 0.0
    %1133 = vmatprep.subr.mxu0 0.0
    %1134 = vmatpush1.msra.mxu0 0.0
    %1135 = vmatprep.subr.mxu0 0.0
    %1136 = vmatpush1.msra.mxu0 0.0
    %1137 = vmatprep.subr.mxu0 0.0
    %1138 = vmatpush1.msra.mxu0 0.0
    %1139 = vmatprep.subr.mxu0 0.0
    %1140 = vmatpush1.msra.mxu0 0.0
    %1141 = vmatprep.mubr.f32.mxu0 0.0
    %1142 = vmatmul.mubr.f32.gmra.mrb[0].mxu0 %v1075
    %v1143 = vpop.f32.mrb[0].mxu0
    %v1144 = vadd.f32 0.0, %v1143
    %v1145 = vpop.f32.mrb[0].mxu0
    %1146 = vdwg.mxu0
    %1147 = vrot.lane.b32.xlu0 %v205, 48
    %v1148 = vpop.permute.xlu0 %1147
    %v1151 = vsel %vm225, %v1070, 0
    %1153 = vmatprep.subr.mxu0 0.0
    %1154 = vmatpush1.msra.mxu0 %v1148
    %1155 = vmatprep.subr.mxu0 0.0
    %1156 = vmatpush1.msra.mxu0 0.0
    %1157 = vmatprep.subr.mxu0 0.0
    %1158 = vmatpush1.msra.mxu0 0.0
    %1159 = vmatprep.subr.mxu0 0.0
    %1160 = vmatpush1.msra.mxu0 0.0
    %1161 = vmatprep.subr.mxu0 0.0
    %1162 = vmatpush1.msra.mxu0 0.0
    %1163 = vmatprep.subr.mxu0 0.0
    %1164 = vmatpush1.msra.mxu0 0.0
    %1165 = vmatprep.subr.mxu0 0.0
    %1166 = vmatpush1.msra.mxu0 0.0
    %1167 = vmatprep.subr.mxu0 0.0
    %1168 = vmatpush1.msra.mxu0 0.0
    %1169 = vmatprep.subr.mxu0 0.0
    %1170 = vmatpush1.msra.mxu0 0.0
    %1171 = vmatprep.subr.mxu0 0.0
    %1172 = vmatpush1.msra.mxu0 0.0
    %1173 = vmatprep.subr.mxu0 0.0
    %1174 = vmatpush1.msra.mxu0 0.0
    %1175 = vmatprep.subr.mxu0 0.0
    %1176 = vmatpush1.msra.mxu0 0.0
    %1177 = vmatprep.subr.mxu0 0.0
    %1178 = vmatpush1.msra.mxu0 0.0
    %1179 = vmatprep.subr.mxu0 0.0
    %1180 = vmatpush1.msra.mxu0 0.0
    %1181 = vmatprep.subr.mxu0 0.0
    %1182 = vmatpush1.msra.mxu0 0.0
    %1183 = vmatprep.subr.mxu0 0.0
    %1184 = vmatpush1.msra.mxu0 0.0
    %1185 = vmatprep.subr.mxu0 0.0
    %1186 = vmatpush1.msra.mxu0 0.0
    %1187 = vmatprep.subr.mxu0 0.0
    %1188 = vmatpush1.msra.mxu0 0.0
    %1189 = vmatprep.subr.mxu0 0.0
    %1190 = vmatpush1.msra.mxu0 0.0
    %1191 = vmatprep.subr.mxu0 0.0
    %1192 = vmatpush1.msra.mxu0 0.0
    %1193 = vmatprep.subr.mxu0 0.0
    %1194 = vmatpush1.msra.mxu0 0.0
    %1195 = vmatprep.subr.mxu0 0.0
    %1196 = vmatpush1.msra.mxu0 0.0
    %1197 = vmatprep.subr.mxu0 0.0
    %1198 = vmatpush1.msra.mxu0 0.0
    %1199 = vmatprep.subr.mxu0 0.0
    %1200 = vmatpush1.msra.mxu0 0.0
    %1201 = vmatprep.subr.mxu0 0.0
    %1202 = vmatpush1.msra.mxu0 0.0
    %1203 = vmatprep.subr.mxu0 0.0
    %1204 = vmatpush1.msra.mxu0 0.0
    %1205 = vmatprep.subr.mxu0 0.0
    %1206 = vmatpush1.msra.mxu0 0.0
    %1207 = vmatprep.subr.mxu0 0.0
    %1208 = vmatpush1.msra.mxu0 0.0
    %1209 = vmatprep.subr.mxu0 0.0
    %1210 = vmatpush1.msra.mxu0 0.0
    %1211 = vmatprep.subr.mxu0 0.0
    %1212 = vmatpush1.msra.mxu0 0.0
    %1213 = vmatprep.subr.mxu0 0.0
    %1214 = vmatpush1.msra.mxu0 0.0
    %1215 = vmatprep.subr.mxu0 0.0
    %1216 = vmatpush1.msra.mxu0 0.0
    %1217 = vmatprep.mubr.f32.mxu0 0.0
    %1218 = vmatmul.mubr.f32.gmra.mrb[0].mxu0 %v1151
    %v1219 = vpop.f32.mrb[0].mxu0
    %v1220 = vadd.f32 0.0, %v1219
    %v1221 = vpop.f32.mrb[0].mxu0
    %1222 = vdwg.mxu0
    %1223 = vrot.lane.b32.xlu0 %v200, 104
    %v1224 = vpop.permute.xlu0 %1223
    %1225 = vrot.lane.b32.xlu0 %v200, 72
    %v1226 = vpop.permute.xlu0 %1225
    %v1227 = vsel %vm225, %v1224, 0
    %v1229 = vsel %vm225, %v1226, 0
    %1231 = vmatprep.subr.mxu0 0.0
    %1232 = vmatpush1.xpose.msra.mxu0 %v1229
    %1233 = vmatprep.subr.mxu0 0.0
    %1234 = vmatpush1.xpose.msra.mxu0 0.0
    %1235 = vmatprep.subr.mxu0 0.0
    %1236 = vmatpush1.xpose.msra.mxu0 0.0
    %1237 = vmatprep.subr.mxu0 0.0
    %1238 = vmatpush1.xpose.msra.mxu0 0.0
    %1239 = vmatprep.subr.mxu0 0.0
    %1240 = vmatpush1.xpose.msra.mxu0 0.0
    %1241 = vmatprep.subr.mxu0 0.0
    %1242 = vmatpush1.xpose.msra.mxu0 0.0
    %1243 = vmatprep.subr.mxu0 0.0
    %1244 = vmatpush1.xpose.msra.mxu0 0.0
    %1245 = vmatprep.subr.mxu0 0.0
    %1246 = vmatpush1.xpose.msra.mxu0 0.0
    %1247 = vmatprep.subr.mxu0 0.0
    %1248 = vmatpush1.xpose.msra.mxu0 0.0
    %1249 = vmatprep.subr.mxu0 0.0
    %1250 = vmatpush1.xpose.msra.mxu0 0.0
    %1251 = vmatprep.subr.mxu0 0.0
    %1252 = vmatpush1.xpose.msra.mxu0 0.0
    %1253 = vmatprep.subr.mxu0 0.0
    %1254 = vmatpush1.xpose.msra.mxu0 0.0
    %1255 = vmatprep.subr.mxu0 0.0
    %1256 = vmatpush1.xpose.msra.mxu0 0.0
    %1257 = vmatprep.subr.mxu0 0.0
    %1258 = vmatpush1.xpose.msra.mxu0 0.0
    %1259 = vmatprep.subr.mxu0 0.0
    %1260 = vmatpush1.xpose.msra.mxu0 0.0
    %1261 = vmatprep.subr.mxu0 0.0
    %1262 = vmatpush1.xpose.msra.mxu0 0.0
    %1263 = vmatprep.subr.mxu0 0.0
    %1264 = vmatpush1.xpose.msra.mxu0 0.0
    %1265 = vmatprep.subr.mxu0 0.0
    %1266 = vmatpush1.xpose.msra.mxu0 0.0
    %1267 = vmatprep.subr.mxu0 0.0
    %1268 = vmatpush1.xpose.msra.mxu0 0.0
    %1269 = vmatprep.subr.mxu0 0.0
    %1270 = vmatpush1.xpose.msra.mxu0 0.0
    %1271 = vmatprep.subr.mxu0 0.0
    %1272 = vmatpush1.xpose.msra.mxu0 0.0
    %1273 = vmatprep.subr.mxu0 0.0
    %1274 = vmatpush1.xpose.msra.mxu0 0.0
    %1275 = vmatprep.subr.mxu0 0.0
    %1276 = vmatpush1.xpose.msra.mxu0 0.0
    %1277 = vmatprep.subr.mxu0 0.0
    %1278 = vmatpush1.xpose.msra.mxu0 0.0
    %1279 = vmatprep.subr.mxu0 0.0
    %1280 = vmatpush1.xpose.msra.mxu0 0.0
    %1281 = vmatprep.subr.mxu0 0.0
    %1282 = vmatpush1.xpose.msra.mxu0 0.0
    %1283 = vmatprep.subr.mxu0 0.0
    %1284 = vmatpush1.xpose.msra.mxu0 0.0
    %1285 = vmatprep.subr.mxu0 0.0
    %1286 = vmatpush1.xpose.msra.mxu0 0.0
    %1287 = vmatprep.subr.mxu0 0.0
    %1288 = vmatpush1.xpose.msra.mxu0 0.0
    %1289 = vmatprep.subr.mxu0 0.0
    %1290 = vmatpush1.xpose.msra.mxu0 0.0
    %1291 = vmatprep.subr.mxu0 0.0
    %1292 = vmatpush1.xpose.msra.mxu0 0.0
    %1293 = vmatprep.subr.mxu0 0.0
    %1294 = vmatpush1.xpose.msra.mxu0 0.0
    %1295 = vmatprep.mubr.f32.mxu0 0.0
    %1296 = vmatmul.mubr.f32.gmra.mrb[0].mxu0 %v1227
    %v1297 = vpop.f32.mrb[0].mxu0
    %v1298 = vadd.f32 0.0, %v1297
    %v1299 = vpop.f32.mrb[0].mxu0
    %1300 = vdwg.mxu0
    %1301 = vrot.lane.b32.xlu0 %v205, 104
    %v1302 = vpop.permute.xlu0 %1301
    %1303 = vrot.lane.b32.xlu0 %v205, 72
    %v1304 = vpop.permute.xlu0 %1303
    %v1305 = vsel %vm225, %v1302, 0
    %v1307 = vsel %vm225, %v1304, 0
    %1309 = vmatprep.subr.mxu0 0.0
    %1310 = vmatpush1.xpose.msra.mxu0 %v1307
    %1311 = vmatprep.subr.mxu0 0.0
    %1312 = vmatpush1.xpose.msra.mxu0 0.0
    %1313 = vmatprep.subr.mxu0 0.0
    %1314 = vmatpush1.xpose.msra.mxu0 0.0
    %1315 = vmatprep.subr.mxu0 0.0
    %1316 = vmatpush1.xpose.msra.mxu0 0.0
    %1317 = vmatprep.subr.mxu0 0.0
    %1318 = vmatpush1.xpose.msra.mxu0 0.0
    %1319 = vmatprep.subr.mxu0 0.0
    %1320 = vmatpush1.xpose.msra.mxu0 0.0
    %1321 = vmatprep.subr.mxu0 0.0
    %1322 = vmatpush1.xpose.msra.mxu0 0.0
    %1323 = vmatprep.subr.mxu0 0.0
    %1324 = vmatpush1.xpose.msra.mxu0 0.0
    %1325 = vmatprep.subr.mxu0 0.0
    %1326 = vmatpush1.xpose.msra.mxu0 0.0
    %1327 = vmatprep.subr.mxu0 0.0
    %1328 = vmatpush1.xpose.msra.mxu0 0.0
    %1329 = vmatprep.subr.mxu0 0.0
    %1330 = vmatpush1.xpose.msra.mxu0 0.0
    %1331 = vmatprep.subr.mxu0 0.0
    %1332 = vmatpush1.xpose.msra.mxu0 0.0
    %1333 = vmatprep.subr.mxu0 0.0
    %1334 = vmatpush1.xpose.msra.mxu0 0.0
    %1335 = vmatprep.subr.mxu0 0.0
    %1336 = vmatpush1.xpose.msra.mxu0 0.0
    %1337 = vmatprep.subr.mxu0 0.0
    %1338 = vmatpush1.xpose.msra.mxu0 0.0
    %1339 = vmatprep.subr.mxu0 0.0
    %1340 = vmatpush1.xpose.msra.mxu0 0.0
    %1341 = vmatprep.subr.mxu0 0.0
    %1342 = vmatpush1.xpose.msra.mxu0 0.0
    %1343 = vmatprep.subr.mxu0 0.0
    %1344 = vmatpush1.xpose.msra.mxu0 0.0
    %1345 = vmatprep.subr.mxu0 0.0
    %1346 = vmatpush1.xpose.msra.mxu0 0.0
    %1347 = vmatprep.subr.mxu0 0.0
    %1348 = vmatpush1.xpose.msra.mxu0 0.0
    %1349 = vmatprep.subr.mxu0 0.0
    %1350 = vmatpush1.xpose.msra.mxu0 0.0
    %1351 = vmatprep.subr.mxu0 0.0
    %1352 = vmatpush1.xpose.msra.mxu0 0.0
    %1353 = vmatprep.subr.mxu0 0.0
    %1354 = vmatpush1.xpose.msra.mxu0 0.0
    %1355 = vmatprep.subr.mxu0 0.0
    %1356 = vmatpush1.xpose.msra.mxu0 0.0
    %1357 = vmatprep.subr.mxu0 0.0
    %1358 = vmatpush1.xpose.msra.mxu0 0.0
    %1359 = vmatprep.subr.mxu0 0.0
    %1360 = vmatpush1.xpose.msra.mxu0 0.0
    %1361 = vmatprep.subr.mxu0 0.0
    %1362 = vmatpush1.xpose.msra.mxu0 0.0
    %1363 = vmatprep.subr.mxu0 0.0
    %1364 = vmatpush1.xpose.msra.mxu0 0.0
    %1365 = vmatprep.subr.mxu0 0.0
    %1366 = vmatpush1.xpose.msra.mxu0 0.0
    %1367 = vmatprep.subr.mxu0 0.0
    %1368 = vmatpush1.xpose.msra.mxu0 0.0
    %1369 = vmatprep.subr.mxu0 0.0
    %1370 = vmatpush1.xpose.msra.mxu0 0.0
    %1371 = vmatprep.subr.mxu0 0.0
    %1372 = vmatpush1.xpose.msra.mxu0 0.0
    %1373 = vmatprep.mubr.f32.mxu0 0.0
    %1374 = vmatmul.mubr.f32.gmra.mrb[0].mxu0 %v1305
    %v1375 = vpop.f32.mrb[0].mxu0
    %v1376 = vadd.f32 0.0, %v1375
    %v1377 = vpop.f32.mrb[0].mxu0
    %1378 = vdwg.mxu0
    %v1379 = vmul.f32 %v1298, 0.35355338
    %v1380 = vmul.f32 %v1376, 0.35355338
    %v1381 = vadd.f32 %v1379, %v215
    %v1382 = vadd.f32 %v1380, %v219
    %v1383 = vsel %vm225, %v1381, -inf
    %1384 = vmax.xlane.f32.xlu0 %v1383
    %v1385 = vpop.xlane.xlu0 %1384
    %v1386 = vsel %vm225, %v1382, -inf
    %1387 = vmax.xlane.f32.xlu0 %v1386
    %v1388 = vpop.xlane.xlu0 %1387
    %v1389 = vsub.f32 %v1381, %v1385
    %v1390 = vsub.f32 %v1382, %v1388
    %v1391 = vmul.f32 %v1389, 1.442695
    %v1392 = vpow.pop %v1391
    %v1393 = vmul.f32 %v1390, 1.442695
    %v1394 = vpow.pop %v1393
    %v1395 = vsel %vm225, %v1392, 0.0
    %1396 = vadd.xlane.f32.xlu0 %v1395
    %v1397 = vpop.xlane.xlu0 %1396
    %v1398 = vsel %vm225, %v1394, 0.0
    %1399 = vadd.xlane.f32.xlu0 %v1398
    %v1400 = vpop.xlane.xlu0 %1399
    %v1401 = vrcp.pop %v1397
    %v1402 = vmul.f32 %v1392, %v1401
    %v1403 = vrcp.pop %v1400
    %v1404 = vmul.f32 %v1394, %v1403
    %1405 = vrot.lane.b32.xlu0 %v200, 40
    %v1406 = vpop.permute.xlu0 %1405
    %v1409 = vsel %vm225, %v1402, 0
    %1411 = vmatprep.subr.mxu0 0.0
    %1412 = vmatpush1.msra.mxu0 %v1406
    %1413 = vmatprep.subr.mxu0 0.0
    %1414 = vmatpush1.msra.mxu0 0.0
    %1415 = vmatprep.subr.mxu0 0.0
    %1416 = vmatpush1.msra.mxu0 0.0
    %1417 = vmatprep.subr.mxu0 0.0
    %1418 = vmatpush1.msra.mxu0 0.0
    %1419 = vmatprep.subr.mxu0 0.0
    %1420 = vmatpush1.msra.mxu0 0.0
    %1421 = vmatprep.subr.mxu0 0.0
    %1422 = vmatpush1.msra.mxu0 0.0
    %1423 = vmatprep.subr.mxu0 0.0
    %1424 = vmatpush1.msra.mxu0 0.0
    %1425 = vmatprep.subr.mxu0 0.0
    %1426 = vmatpush1.msra.mxu0 0.0
    %1427 = vmatprep.subr.mxu0 0.0
    %1428 = vmatpush1.msra.mxu0 0.0
    %1429 = vmatprep.subr.mxu0 0.0
    %1430 = vmatpush1.msra.mxu0 0.0
    %1431 = vmatprep.subr.mxu0 0.0
    %1432 = vmatpush1.msra.mxu0 0.0
    %1433 = vmatprep.subr.mxu0 0.0
    %1434 = vmatpush1.msra.mxu0 0.0
    %1435 = vmatprep.subr.mxu0 0.0
    %1436 = vmatpush1.msra.mxu0 0.0
    %1437 = vmatprep.subr.mxu0 0.0
    %1438 = vmatpush1.msra.mxu0 0.0
    %1439 = vmatprep.subr.mxu0 0.0
    %1440 = vmatpush1.msra.mxu0 0.0
    %1441 = vmatprep.subr.mxu0 0.0
    %1442 = vmatpush1.msra.mxu0 0.0
    %1443 = vmatprep.subr.mxu0 0.0
    %1444 = vmatpush1.msra.mxu0 0.0
    %1445 = vmatprep.subr.mxu0 0.0
    %1446 = vmatpush1.msra.mxu0 0.0
    %1447 = vmatprep.subr.mxu0 0.0
    %1448 = vmatpush1.msra.mxu0 0.0
    %1449 = vmatprep.subr.mxu0 0.0
    %1450 = vmatpush1.msra.mxu0 0.0
    %1451 = vmatprep.subr.mxu0 0.0
    %1452 = vmatpush1.msra.mxu0 0.0
    %1453 = vmatprep.subr.mxu0 0.0
    %1454 = vmatpush1.msra.mxu0 0.0
    %1455 = vmatprep.subr.mxu0 0.0
    %1456 = vmatpush1.msra.mxu0 0.0
    %1457 = vmatprep.subr.mxu0 0.0
    %1458 = vmatpush1.msra.mxu0 0.0
    %1459 = vmatprep.subr.mxu0 0.0
    %1460 = vmatpush1.msra.mxu0 0.0
    %1461 = vmatprep.subr.mxu0 0.0
    %1462 = vmatpush1.msra.mxu0 0.0
    %1463 = vmatprep.subr.mxu0 0.0
    %1464 = vmatpush1.msra.mxu0 0.0
    %1465 = vmatprep.subr.mxu0 0.0
    %1466 = vmatpush1.msra.mxu0 0.0
    %1467 = vmatprep.subr.mxu0 0.0
    %1468 = vmatpush1.msra.mxu0 0.0
    %1469 = vmatprep.subr.mxu0 0.0
    %1470 = vmatpush1.msra.mxu0 0.0
    %1471 = vmatprep.subr.mxu0 0.0
    %1472 = vmatpush1.msra.mxu0 0.0
    %1473 = vmatprep.subr.mxu0 0.0
    %1474 = vmatpush1.msra.mxu0 0.0
    %1475 = vmatprep.mubr.f32.mxu0 0.0
    %1476 = vmatmul.mubr.f32.gmra.mrb[0].mxu0 %v1409
    %v1477 = vpop.f32.mrb[0].mxu0
    %v1478 = vadd.f32 0.0, %v1477
    %v1479 = vpop.f32.mrb[0].mxu0
    %1480 = vdwg.mxu0
    %1481 = vrot.lane.b32.xlu0 %v205, 40
    %v1482 = vpop.permute.xlu0 %1481
    %v1485 = vsel %vm225, %v1404, 0
    %1487 = vmatprep.subr.mxu0 0.0
    %1488 = vmatpush1.msra.mxu0 %v1482
    %1489 = vmatprep.subr.mxu0 0.0
    %1490 = vmatpush1.msra.mxu0 0.0
    %1491 = vmatprep.subr.mxu0 0.0
    %1492 = vmatpush1.msra.mxu0 0.0
    %1493 = vmatprep.subr.mxu0 0.0
    %1494 = vmatpush1.msra.mxu0 0.0
    %1495 = vmatprep.subr.mxu0 0.0
    %1496 = vmatpush1.msra.mxu0 0.0
    %1497 = vmatprep.subr.mxu0 0.0
    %1498 = vmatpush1.msra.mxu0 0.0
    %1499 = vmatprep.subr.mxu0 0.0
    %1500 = vmatpush1.msra.mxu0 0.0
    %1501 = vmatprep.subr.mxu0 0.0
    %1502 = vmatpush1.msra.mxu0 0.0
    %1503 = vmatprep.subr.mxu0 0.0
    %1504 = vmatpush1.msra.mxu0 0.0
    %1505 = vmatprep.subr.mxu0 0.0
    %1506 = vmatpush1.msra.mxu0 0.0
    %1507 = vmatprep.subr.mxu0 0.0
    %1508 = vmatpush1.msra.mxu0 0.0
    %1509 = vmatprep.subr.mxu0 0.0
    %1510 = vmatpush1.msra.mxu0 0.0
    %1511 = vmatprep.subr.mxu0 0.0
    %1512 = vmatpush1.msra.mxu0 0.0
    %1513 = vmatprep.subr.mxu0 0.0
    %1514 = vmatpush1.msra.mxu0 0.0
    %1515 = vmatprep.subr.mxu0 0.0
    %1516 = vmatpush1.msra.mxu0 0.0
    %1517 = vmatprep.subr.mxu0 0.0
    %1518 = vmatpush1.msra.mxu0 0.0
    %1519 = vmatprep.subr.mxu0 0.0
    %1520 = vmatpush1.msra.mxu0 0.0
    %1521 = vmatprep.subr.mxu0 0.0
    %1522 = vmatpush1.msra.mxu0 0.0
    %1523 = vmatprep.subr.mxu0 0.0
    %1524 = vmatpush1.msra.mxu0 0.0
    %1525 = vmatprep.subr.mxu0 0.0
    %1526 = vmatpush1.msra.mxu0 0.0
    %1527 = vmatprep.subr.mxu0 0.0
    %1528 = vmatpush1.msra.mxu0 0.0
    %1529 = vmatprep.subr.mxu0 0.0
    %1530 = vmatpush1.msra.mxu0 0.0
    %1531 = vmatprep.subr.mxu0 0.0
    %1532 = vmatpush1.msra.mxu0 0.0
    %1533 = vmatprep.subr.mxu0 0.0
    %1534 = vmatpush1.msra.mxu0 0.0
    %1535 = vmatprep.subr.mxu0 0.0
    %1536 = vmatpush1.msra.mxu0 0.0
    %1537 = vmatprep.subr.mxu0 0.0
    %1538 = vmatpush1.msra.mxu0 0.0
    %1539 = vmatprep.subr.mxu0 0.0
    %1540 = vmatpush1.msra.mxu0 0.0
    %1541 = vmatprep.subr.mxu0 0.0
    %1542 = vmatpush1.msra.mxu0 0.0
    %1543 = vmatprep.subr.mxu0 0.0
    %1544 = vmatpush1.msra.mxu0 0.0
    %1545 = vmatprep.subr.mxu0 0.0
    %1546 = vmatpush1.msra.mxu0 0.0
    %1547 = vmatprep.subr.mxu0 0.0
    %1548 = vmatpush1.msra.mxu0 0.0
    %1549 = vmatprep.subr.mxu0 0.0
    %1550 = vmatpush1.msra.mxu0 0.0
    %1551 = vmatprep.mubr.f32.mxu0 0.0
    %1552 = vmatmul.mubr.f32.gmra.mrb[0].mxu0 %v1485
    %v1553 = vpop.f32.mrb[0].mxu0
    %v1554 = vadd.f32 0.0, %v1553
    %v1555 = vpop.f32.mrb[0].mxu0
    %1556 = vdwg.mxu0
    %1559 = vrot.lane.b32.xlu0 %v810, 8
    %v1560 = vpop.permute.xlu0 %1559
    %1561 = vrot.lane.b32.xlu0 %v886, 8
    %v1562 = vpop.permute.xlu0 %1561
    %1567 = vrot.lane.b32.xlu0 %v1144, 16
    %v1568 = vpop.permute.xlu0 %1567
    %1569 = vrot.lane.b32.xlu0 %v1220, 16
    %v1570 = vpop.permute.xlu0 %1569
    %1575 = vrot.lane.b32.xlu0 %v1478, 24
    %v1576 = vpop.permute.xlu0 %1575
    %1577 = vrot.lane.b32.xlu0 %v1554, 24
    %v1578 = vpop.permute.xlu0 %1577
    %v1581 = vsel %vm225, %v476, %v1560
    %v1582 = vsel %vm225, %v552, %v1562
    %vm1583 = vcmask 130048
    %v1584 = vsel %vm1583, %v1581, %v1568
    %v1585 = vsel %vm1583, %v1582, %v1570
    %vm1586 = vcmask 195584
    %v1587 = vsel %vm1586, %v1584, %v1576
    %v1588 = vsel %vm1586, %v1585, %v1578
    %v1589 = vld [vmem:[%s6] sm:$0xff]
    %v1590 = vld [vmem:[%s6 + $0x8] sm:$0xff]
    %v1591 = vld [vmem:[%s6 + $0x10] sm:$0xff]
    %v1592 = vld [vmem:[%s6 + $0x18] sm:$0xff]
    %v1593 = vld [vmem:[%s7] sm:$0x1]
    %v1595 = vlaneseq
    %v1596 = vshrl.u32 %v1595, 7
    %v1597 = vsub.s32 0, %v1596
    %v1598 = vrot.slane %v1593, %v1597
    %v1601 = vsel %vm72, %v1587, 0
    %v1604 = vsel %vm72, %v1588, 0
    %1606 = vmatprep.subr.mxu0 0.0
    %1607 = vmatpush1.msra.mxu0 %v1589
    %1608 = vmatprep.subr.mxu0 0.0
    %1609 = vmatpush1.msra.mxu0 %v1590
    %1610 = vmatprep.subr.mxu0 0.0
    %1611 = vmatpush1.msra.mxu0 %v1591
    %1612 = vmatprep.subr.mxu0 0.0
    %1613 = vmatpush1.msra.mxu0 %v1592
    %1614 = vmatprep.subr.mxu0 0.0
    %1615 = vmatpush1.msra.mxu0 0.0
    %1616 = vmatprep.subr.mxu0 0.0
    %1617 = vmatpush1.msra.mxu0 0.0
    %1618 = vmatprep.subr.mxu0 0.0
    %1619 = vmatpush1.msra.mxu0 0.0
    %1620 = vmatprep.subr.mxu0 0.0
    %1621 = vmatpush1.msra.mxu0 0.0
    %1622 = vmatprep.subr.mxu0 0.0
    %1623 = vmatpush1.msra.mxu0 0.0
    %1624 = vmatprep.subr.mxu0 0.0
    %1625 = vmatpush1.msra.mxu0 0.0
    %1626 = vmatprep.subr.mxu0 0.0
    %1627 = vmatpush1.msra.mxu0 0.0
    %1628 = vmatprep.subr.mxu0 0.0
    %1629 = vmatpush1.msra.mxu0 0.0
    %1630 = vmatprep.subr.mxu0 0.0
    %1631 = vmatpush1.msra.mxu0 0.0
    %1632 = vmatprep.subr.mxu0 0.0
    %1633 = vmatpush1.msra.mxu0 0.0
    %1634 = vmatprep.subr.mxu0 0.0
    %1635 = vmatpush1.msra.mxu0 0.0
    %1636 = vmatprep.subr.mxu0 0.0
    %1637 = vmatpush1.msra.mxu0 0.0
    %1638 = vmatprep.subr.mxu0 0.0
    %1639 = vmatpush1.msra.mxu0 0.0
    %1640 = vmatprep.subr.mxu0 0.0
    %1641 = vmatpush1.msra.mxu0 0.0
    %1642 = vmatprep.subr.mxu0 0.0
    %1643 = vmatpush1.msra.mxu0 0.0
    %1644 = vmatprep.subr.mxu0 0.0
    %1645 = vmatpush1.msra.mxu0 0.0
    %1646 = vmatprep.subr.mxu0 0.0
    %1647 = vmatpush1.msra.mxu0 0.0
    %1648 = vmatprep.subr.mxu0 0.0
    %1649 = vmatpush1.msra.mxu0 0.0
    %1650 = vmatprep.subr.mxu0 0.0
    %1651 = vmatpush1.msra.mxu0 0.0
    %1652 = vmatprep.subr.mxu0 0.0
    %1653 = vmatpush1.msra.mxu0 0.0
    %1654 = vmatprep.subr.mxu0 0.0
    %1655 = vmatpush1.msra.mxu0 0.0
    %1656 = vmatprep.subr.mxu0 0.0
    %1657 = vmatpush1.msra.mxu0 0.0
    %1658 = vmatprep.subr.mxu0 0.0
    %1659 = vmatpush1.msra.mxu0 0.0
    %1660 = vmatprep.subr.mxu0 0.0
    %1661 = vmatpush1.msra.mxu0 0.0
    %1662 = vmatprep.subr.mxu0 0.0
    %1663 = vmatpush1.msra.mxu0 0.0
    %1664 = vmatprep.subr.mxu0 0.0
    %1665 = vmatpush1.msra.mxu0 0.0
    %1666 = vmatprep.subr.mxu0 0.0
    %1667 = vmatpush1.msra.mxu0 0.0
    %1668 = vmatprep.subr.mxu0 0.0
    %1669 = vmatpush1.msra.mxu0 0.0
    %1670 = vmatprep.mubr.f32.mxu0 0.0
    %1671 = vmatmul.mubr.f32.gmra.mrb[0].mxu0 %v1601
    %v1672 = vpop.f32.mrb[0].mxu0
    %v1673 = vadd.f32 %v1598, %v1672
    %v1674 = vpop.f32.mrb[0].mxu0
    %1675 = vmatprep.mubr.f32.mxu0 0.0
    %1676 = vmatmul.mubr.f32.gmra.mrb[0].mxu0 %v1604
    %v1677 = vpop.f32.mrb[0].mxu0
    %v1678 = vadd.f32 %v1598, %v1677
    %v1679 = vpop.f32.mrb[0].mxu0
    %1680 = vdwg.mxu0
    %v1681 = vadd.f32 %v1673, %v114
    %v1682 = vadd.f32 %v1678, %v115
    %v1683 = vld [vmem:[%s8] sm:$0x1]
    %v1684 = vld [vmem:[%s9] sm:$0x1]
    %v1685 = vsel %vm72, %v1681, 0.0
    %1686 = vadd.xlane.f32.xlu0 %v1685
    %v1687 = vpop.xlane.xlu0 %1686
    %v1688 = vsel %vm72, %v1682, 0.0
    %1689 = vadd.xlane.f32.xlu0 %v1688
    %v1690 = vpop.xlane.xlu0 %1689
    %v1691 = vmul.f32 %v1687, %v79
    %v1692 = vmul.f32 %v1690, %v79
    %v1693 = vsub.f32 %v1681, %v1691
    %v1694 = vsub.f32 %v1682, %v1692
    %v1695 = vmul.f32 %v1693, %v1693
    %v1696 = vmul.f32 %v1694, %v1694
    %v1697 = vsel %vm72, %v1695, 0.0
    %1698 = vadd.xlane.f32.xlu0 %v1697
    %v1699 = vpop.xlane.xlu0 %1698
    %v1700 = vsel %vm72, %v1696, 0.0
    %1701 = vadd.xlane.f32.xlu0 %v1700
    %v1702 = vpop.xlane.xlu0 %1701
    %v1703 = vmul.f32 %v1699, %v79
    %v1704 = vmul.f32 %v1702, %v79
    %v1705 = vadd.f32 %v1703, 1e-12
    %v1706 = vadd.f32 %v1704, 1e-12
    %v1707 = vrsqrt.pop %v1705
    %v1708 = vrsqrt.pop %v1706
    %v1709 = vmul.f32 %v1693, %v1707
    %v1710 = vmul.f32 %v1694, %v1708
    %v1712 = vlaneseq
    %v1713 = vshrl.u32 %v1712, 7
    %v1714 = vsub.s32 0, %v1713
    %v1715 = vrot.slane %v1683, %v1714
    %v1717 = vmul.f32 %v1709, %v1715
    %v1718 = vmul.f32 %v1710, %v1715
    %v1720 = vlaneseq
    %v1721 = vshrl.u32 %v1720, 7
    %v1722 = vsub.s32 0, %v1721
    %v1723 = vrot.slane %v1684, %v1722
    %v1725 = vadd.f32 %v1717, %v1723
    %v1726 = vadd.f32 %v1718, %v1723
    %v1727 = vld [vmem:[%s10] sm:$0xff]
    %v1728 = vld [vmem:[%s10 + $0x8] sm:$0xff]
    %v1729 = vld [vmem:[%s10 + $0x10] sm:$0xff]
    %v1730 = vld [vmem:[%s10 + $0x18] sm:$0xff]
    %v1731 = vld [vmem:[%s11] sm:$0x1]
    %v1733 = vlaneseq
    %v1734 = vshrl.u32 %v1733, 7
    %v1735 = vsub.s32 0, %v1734
    %v1736 = vrot.slane %v1731, %v1735
    %v1739 = vsel %vm72, %v1725, 0
    %v1742 = vsel %vm72, %v1726, 0
    %1744 = vmatprep.subr.mxu0 0.0
    %1745 = vmatpush1.msra.mxu0 %v1727
    %1746 = vmatprep.subr.mxu0 0.0
    %1747 = vmatpush1.msra.mxu0 %v1728
    %1748 = vmatprep.subr.mxu0 0.0
    %1749 = vmatpush1.msra.mxu0 %v1729
    %1750 = vmatprep.subr.mxu0 0.0
    %1751 = vmatpush1.msra.mxu0 %v1730
    %1752 = vmatprep.subr.mxu0 0.0
    %1753 = vmatpush1.msra.mxu0 0.0
    %1754 = vmatprep.subr.mxu0 0.0
    %1755 = vmatpush1.msra.mxu0 0.0
    %1756 = vmatprep.subr.mxu0 0.0
    %1757 = vmatpush1.msra.mxu0 0.0
    %1758 = vmatprep.subr.mxu0 0.0
    %1759 = vmatpush1.msra.mxu0 0.0
    %1760 = vmatprep.subr.mxu0 0.0
    %1761 = vmatpush1.msra.mxu0 0.0
    %1762 = vmatprep.subr.mxu0 0.0
    %1763 = vmatpush1.msra.mxu0 0.0
    %1764 = vmatprep.subr.mxu0 0.0
    %1765 = vmatpush1.msra.mxu0 0.0
    %1766 = vmatprep.subr.mxu0 0.0
    %1767 = vmatpush1.msra.mxu0 0.0
    %1768 = vmatprep.subr.mxu0 0.0
    %1769 = vmatpush1.msra.mxu0 0.0
    %1770 = vmatprep.subr.mxu0 0.0
    %1771 = vmatpush1.msra.mxu0 0.0
    %1772 = vmatprep.subr.mxu0 0.0
    %1773 = vmatpush1.msra.mxu0 0.0
    %1774 = vmatprep.subr.mxu0 0.0
    %1775 = vmatpush1.msra.mxu0 0.0
    %1776 = vmatprep.subr.mxu0 0.0
    %1777 = vmatpush1.msra.mxu0 0.0
    %1778 = vmatprep.subr.mxu0 0.0
    %1779 = vmatpush1.msra.mxu0 0.0
    %1780 = vmatprep.subr.mxu0 0.0
    %1781 = vmatpush1.msra.mxu0 0.0
    %1782 = vmatprep.subr.mxu0 0.0
    %1783 = vmatpush1.msra.mxu0 0.0
    %1784 = vmatprep.subr.mxu0 0.0
    %1785 = vmatpush1.msra.mxu0 0.0
    %1786 = vmatprep.subr.mxu0 0.0
    %1787 = vmatpush1.msra.mxu0 0.0
    %1788 = vmatprep.subr.mxu0 0.0
    %1789 = vmatpush1.msra.mxu0 0.0
    %1790 = vmatprep.subr.mxu0 0.0
    %1791 = vmatpush1.msra.mxu0 0.0
    %1792 = vmatprep.subr.mxu0 0.0
    %1793 = vmatpush1.msra.mxu0 0.0
    %1794 = vmatprep.subr.mxu0 0.0
    %1795 = vmatpush1.msra.mxu0 0.0
    %1796 = vmatprep.subr.mxu0 0.0
    %1797 = vmatpush1.msra.mxu0 0.0
    %1798 = vmatprep.subr.mxu0 0.0
    %1799 = vmatpush1.msra.mxu0 0.0
    %1800 = vmatprep.subr.mxu0 0.0
    %1801 = vmatpush1.msra.mxu0 0.0
    %1802 = vmatprep.subr.mxu0 0.0
    %1803 = vmatpush1.msra.mxu0 0.0
    %1804 = vmatprep.subr.mxu0 0.0
    %1805 = vmatpush1.msra.mxu0 0.0
    %1806 = vmatprep.subr.mxu0 0.0
    %1807 = vmatpush1.msra.mxu0 0.0
    %1808 = vmatprep.mubr.f32.mxu0 0.0
    %1809 = vmatmul.mubr.f32.gmra.mrb[0].mxu0 %v1739
    %v1810 = vpop.f32.mrb[0].mxu0
    %v1811 = vadd.f32 %v1736, %v1810
    %v1812 = vpop.f32.mrb[0].mxu0
    %1813 = vmatprep.mubr.f32.mxu0 0.0
    %1814 = vmatmul.mubr.f32.gmra.mrb[0].mxu0 %v1742
    %v1815 = vpop.f32.mrb[0].mxu0
    %v1816 = vadd.f32 %v1736, %v1815
    %v1817 = vpop.f32.mrb[0].mxu0
    %1818 = vdwg.mxu0
    %v1819 = vmul.f32 %v1811, 0.5
    %v1820 = vmul.f32 %v1816, 0.5
    %v1821 = vmul.f32 %v1811, 0.044715
    %v1822 = vmul.f32 %v1816, 0.044715
    %v1823 = vmul.f32 %v1821, %v1811
    %v1824 = vmul.f32 %v1822, %v1816
    %v1825 = vmul.f32 %v1823, %v1811
    %v1826 = vmul.f32 %v1824, %v1816
    %v1827 = vadd.f32 %v1811, %v1825
    %v1828 = vadd.f32 %v1816, %v1826
    %v1829 = vmul.f32 %v1827, 0.7978846
    %v1830 = vmul.f32 %v1828, 0.7978846
    %v1831 = vtanh.pop %v1829
    %v1832 = vtanh.pop %v1830
    %v1833 = vadd.f32 %v1831, 1.0
    %v1834 = vadd.f32 %v1832, 1.0
    %v1835 = vmul.f32 %v1819, %v1833
    %v1836 = vmul.f32 %v1820, %v1834
    %v1837 = vld [vmem:[%s12] sm:$0xff]
    %v1838 = vld [vmem:[%s12 + $0x8] sm:$0xff]
    %v1839 = vld [vmem:[%s12 + $0x10] sm:$0xff]
    %v1840 = vld [vmem:[%s12 + $0x18] sm:$0xff]
    %v1841 = vld [vmem:[%s12 + $0x20] sm:$0xff]
    %v1842 = vld [vmem:[%s12 + $0x28] sm:$0xff]
    %v1843 = vld [vmem:[%s12 + $0x30] sm:$0xff]
    %v1844 = vld [vmem:[%s12 + $0x38] sm:$0xff]
    %v1845 = vld [vmem:[%s13] sm:$0x1]
    %v1847 = vlaneseq
    %v1848 = vshrl.u32 %v1847, 7
    %v1849 = vsub.s32 0, %v1848
    %v1850 = vrot.slane %v1845, %v1849
    %vm1852 = vcmask 523264
    %v1854 = vsel %vm1852, %v1835, 0
    %v1857 = vsel %vm1852, %v1836, 0
    %1859 = vmatprep.subr.mxu0 0.0
    %1860 = vmatpush1.msra.mxu0 %v1837
    %1861 = vmatprep.subr.mxu0 0.0
    %1862 = vmatpush1.msra.mxu0 %v1838
    %1863 = vmatprep.subr.mxu0 0.0
    %1864 = vmatpush1.msra.mxu0 %v1839
    %1865 = vmatprep.subr.mxu0 0.0
    %1866 = vmatpush1.msra.mxu0 %v1840
    %1867 = vmatprep.subr.mxu0 0.0
    %1868 = vmatpush1.msra.mxu0 %v1841
    %1869 = vmatprep.subr.mxu0 0.0
    %1870 = vmatpush1.msra.mxu0 %v1842
    %1871 = vmatprep.subr.mxu0 0.0
    %1872 = vmatpush1.msra.mxu0 %v1843
    %1873 = vmatprep.subr.mxu0 0.0
    %1874 = vmatpush1.msra.mxu0 %v1844
    %1875 = vmatprep.subr.mxu0 0.0
    %1876 = vmatpush1.msra.mxu0 0.0
    %1877 = vmatprep.subr.mxu0 0.0
    %1878 = vmatpush1.msra.mxu0 0.0
    %1879 = vmatprep.subr.mxu0 0.0
    %1880 = vmatpush1.msra.mxu0 0.0
    %1881 = vmatprep.subr.mxu0 0.0
    %1882 = vmatpush1.msra.mxu0 0.0
    %1883 = vmatprep.subr.mxu0 0.0
    %1884 = vmatpush1.msra.mxu0 0.0
    %1885 = vmatprep.subr.mxu0 0.0
    %1886 = vmatpush1.msra.mxu0 0.0
    %1887 = vmatprep.subr.mxu0 0.0
    %1888 = vmatpush1.msra.mxu0 0.0
    %1889 = vmatprep.subr.mxu0 0.0
    %1890 = vmatpush1.msra.mxu0 0.0
    %1891 = vmatprep.subr.mxu0 0.0
    %1892 = vmatpush1.msra.mxu0 0.0
    %1893 = vmatprep.subr.mxu0 0.0
    %1894 = vmatpush1.msra.mxu0 0.0
    %1895 = vmatprep.subr.mxu0 0.0
    %1896 = vmatpush1.msra.mxu0 0.0
    %1897 = vmatprep.subr.mxu0 0.0
    %1898 = vmatpush1.msra.mxu0 0.0
    %1899 = vmatprep.subr.mxu0 0.0
    %1900 = vmatpush1.msra.mxu0 0.0
    %1901 = vmatprep.subr.mxu0 0.0
    %1902 = vmatpush1.msra.mxu0 0.0
    %1903 = vmatprep.subr.mxu0 0.0
    %1904 = vmatpush1.msra.mxu0 0.0
    %1905 = vmatprep.subr.mxu0 0.0
    %1906 = vmatpush1.msra.mxu0 0.0
    %1907 = vmatprep.subr.mxu0 0.0
    %1908 = vmatpush1.msra.mxu0 0.0
    %1909 = vmatprep.subr.mxu0 0.0
    %1910 = vmatpush1.msra.mxu0 0.0
    %1911 = vmatprep.subr.mxu0 0.0
    %1912 = vmatpush1.msra.mxu0 0.0
    %1913 = vmatprep.subr.mxu0 0.0
    %1914 = vmatpush1.msra.mxu0 0.0
    %1915 = vmatprep.subr.mxu0 0.0
    %1916 = vmatpush1.msra.mxu0 0.0
    %1917 = vmatprep.subr.mxu0 0.0
    %1918 = vmatpush1.msra.mxu0 0.0
    %1919 = vmatprep.subr.mxu0 0.0
    %1920 = vmatpush1.msra.mxu0 0.0
    %1921 = vmatprep.subr.mxu0 0.0
    %1922 = vmatpush1.msra.mxu0 0.0
    %1923 = vmatprep.mubr.f32.mxu0 0.0
    %1924 = vmatmul.mubr.f32.gmra.mrb[0].mxu0 %v1854
    %v1925 = vpop.f32.mrb[0].mxu0
    %v1926 = vadd.f32 %v1850, %v1925
    %v1927 = vpop.f32.mrb[0].mxu0
    %1928 = vmatprep.mubr.f32.mxu0 0.0
    %1929 = vmatmul.mubr.f32.gmra.mrb[0].mxu0 %v1857
    %v1930 = vpop.f32.mrb[0].mxu0
    %v1931 = vadd.f32 %v1850, %v1930
    %v1932 = vpop.f32.mrb[0].mxu0
    %1933 = vdwg.mxu0
    %v1934 = vadd.f32 %v1926, %v1725
    %v1935 = vadd.f32 %v1931, %v1726
    %v1936 = vld [vmem:[%s14] sm:$0x1]
    %v1937 = vld [vmem:[%s15] sm:$0x1]
    %v1938 = vsel %vm72, %v1934, 0.0
    %1939 = vadd.xlane.f32.xlu0 %v1938
    %v1940 = vpop.xlane.xlu0 %1939
    %v1941 = vsel %vm72, %v1935, 0.0
    %1942 = vadd.xlane.f32.xlu0 %v1941
    %v1943 = vpop.xlane.xlu0 %1942
    %v1944 = vmul.f32 %v1940, %v79
    %v1945 = vmul.f32 %v1943, %v79
    %v1946 = vsub.f32 %v1934, %v1944
    %v1947 = vsub.f32 %v1935, %v1945
    %v1948 = vmul.f32 %v1946, %v1946
    %v1949 = vmul.f32 %v1947, %v1947
    %v1950 = vsel %vm72, %v1948, 0.0
    %1951 = vadd.xlane.f32.xlu0 %v1950
    %v1952 = vpop.xlane.xlu0 %1951
    %v1953 = vsel %vm72, %v1949, 0.0
    %1954 = vadd.xlane.f32.xlu0 %v1953
    %v1955 = vpop.xlane.xlu0 %1954
    %v1956 = vmul.f32 %v1952, %v79
    %v1957 = vmul.f32 %v1955, %v79
    %v1958 = vadd.f32 %v1956, 1e-12
    %v1959 = vadd.f32 %v1957, 1e-12
    %v1960 = vrsqrt.pop %v1958
    %v1961 = vrsqrt.pop %v1959
    %v1962 = vmul.f32 %v1946, %v1960
    %v1963 = vmul.f32 %v1947, %v1961
    %v1965 = vlaneseq
    %v1966 = vshrl.u32 %v1965, 7
    %v1967 = vsub.s32 0, %v1966
    %v1968 = vrot.slane %v1936, %v1967
    %v1970 = vmul.f32 %v1962, %v1968
    %v1971 = vmul.f32 %v1963, %v1968
    %v1973 = vlaneseq
    %v1974 = vshrl.u32 %v1973, 7
    %v1975 = vsub.s32 0, %v1974
    %v1976 = vrot.slane %v1937, %v1975
    %v1978 = vadd.f32 %v1970, %v1976
    %v1979 = vadd.f32 %v1971, %v1976
    %1980 = vst.msk [vmem:[#allocation5] sm:$0xff] %vm72, %v1978
    %1981 = vst.msk [vmem:[#allocation5 + $0x8] sm:$0xff] %vm72, %v1979
    // Predicated region
    $region70: #{tpu_custom_call.1} parent=1 // pred_check
      _
    $region71: #{tpu_custom_call.1} parent=1 // pred_check_branch
      %1983 = sbr.rel (0) target = $region73
    $region72: #{tpu_custom_call.1} parent=1 // pred_region
      %s1985 = ssub.s32 256, 256
      %1986 = vsyncadd [#allocation4], %s1985
      %s1987 = sshll.u32 [#allocation5], 4
      %s1988 = int_to_ptr.vmem [resolvable:$true] %s1987
      %1993 = dma.vmem_to_hbm [thread:$0]  %s1988, 256, %s16, [#allocation4], 128, 128, 8
    $region73: #{tpu_custom_call.1} parent=1 // pred_fallthru
      _
    // Predicated region
    $region74: #{tpu_custom_call.1} parent=1 // pred_check
      _
    $region75: #{tpu_custom_call.1} parent=1 // pred_check_branch
      %1995 = sbr.rel (0) target = $region77
    $region76: #{tpu_custom_call.1} parent=1 // pred_region
      %1996 = dma.done [#allocation4], 256
    $region77: #{tpu_custom_call.1} parent=1 // pred_fallthru
      _
    %1997 = vsyncpa [#allocation3], 1
    %1998 = vsyncpa [#allocation4], 1

</llo_original>
